<compile_context>
chip_gen: v6e
topology: v6e:2x2x1
jax: 0.10.0
libtpu: 0.0.40
codegen_flags: <defaults>
</compile_context>

<pallas_src>
import math

import jax
import jax.numpy as jnp
from jax.experimental import pallas as pl
from jax.experimental.pallas import tpu as pltpu

# ---------------- model config (small, consistent with the module) ----------
B = 2          # batch
T = 8          # tokens / sequence length
D = 32         # model_dim
H = 4          # num_head
DK = D // H    # d_k = d_v
HID = 4 * D    # FFN hidden
LN_EPS = 1e-5
SQRT2 = math.sqrt(2.0)


def _layer_norm(x, gamma, beta):
    mu = jnp.mean(x, axis=-1, keepdims=True)
    var = jnp.mean((x - mu) * (x - mu), axis=-1, keepdims=True)
    return (x - mu) * jax.lax.rsqrt(var + LN_EPS) * gamma + beta


def _gelu_exact(x):
    # PyTorch nn.GELU() default: exact erf formulation.
    return 0.5 * x * (1.0 + jax.lax.erf(x / SQRT2))


def encoder_block_kernel(x_ref, mask_ref, wqk_ref, wo_ref, w1_ref, w2_ref,
                         vec_ref, b1_ref, o_ref):
    # Block = `BB` batch elements flattened into a (BB*T, D) row slab.
    BB = mask_ref.shape[0]                           # static
    x = x_ref[...].astype(jnp.float32)               # (BB*T, D)
    mask = mask_ref[...]                             # (BB, 1, T) key mask

    # Packed small params: rows = [bq, bk, bo, ln1_g, ln1_b, ln2_g, ln2_b, b2]
    vecs = vec_ref[...].astype(jnp.float32)          # (8, D)
    bq, bk, bo = vecs[0:1, :], vecs[1:2, :], vecs[2:3, :]
    ln1_g, ln1_b = vecs[3:4, :], vecs[4:5, :]
    ln2_g, ln2_b = vecs[5:6, :], vecs[6:7, :]
    b2 = vecs[7:8, :]
    b1 = b1_ref[...].astype(jnp.float32)             # (1, HID)
    wo = wo_ref[...]

    # ---------------- MultiHeadAttention ----------------
    # Fused Q/K projection; V == K (PyTorch uses W_k for the value projection).
    qk = jnp.dot(x, wqk_ref[...], preferred_element_type=jnp.float32)  # (BB*T, 2D)
    scale = 1.0 / math.sqrt(DK)
    q = (qk[:, :D] + bq) * scale                     # scale hoisted out of loop
    k = qk[:, D:] + bk                               # v aliases k exactly

    # NOTE: exact-0.0 compare assumes the mask holds exact 0/1 values; a row
    # whose keys are ALL masked degenerates to a uniform softmax (as in PyTorch).
    mask_bias = jnp.where(mask == 0.0, -1e20, 0.0)   # (BB, 1, T), computed once

    x1_blocks = []
    for b in range(BB):                              # static unroll over batch
        q_b = q[b * T:(b + 1) * T, :]                # (T, D)
        k_b = k[b * T:(b + 1) * T, :]
        bias_b = mask_bias[b]                        # (1, T)
        acc = jnp.zeros((T, D), jnp.float32)
        for h in range(H):                           # static unroll over heads
            lo, hi = h * DK, (h + 1) * DK
            # q_b[:,lo:hi] @ k_b[:,lo:hi]^T without an explicit transpose
            # (contract last dims of both operands -> MXU-native trans_b).
            s = jax.lax.dot_general(
                q_b[:, lo:hi], k_b[:, lo:hi],
                (((1,), (1,)), ((), ())),
                preferred_element_type=jnp.float32) + bias_b          # (T, T)
            s = s - jnp.max(s, axis=-1, keepdims=True)
            p = jnp.exp(s)
            # approx reciprocal runs on the otherwise-idle EUP slot
            p = p * pl.reciprocal(jnp.sum(p, axis=-1, keepdims=True), approx=True)
            head_out = jnp.dot(p, k_b[:, lo:hi],
                               preferred_element_type=jnp.float32)    # (T, DK)
            # Fold the head-concat into W_o: accumulate per-head contribution.
            acc = acc + jnp.dot(head_out, wo[lo:hi, :],
                                preferred_element_type=jnp.float32)   # (T, D)
        x1_blocks.append(acc)
    attn = x1_blocks[0] if BB == 1 else jnp.concatenate(x1_blocks, axis=0)

    x1 = attn + bo + x                               # dropout (eval) -> identity
    x1 = _layer_norm(x1, ln1_g, ln1_b)

    # ---------------- FeedForwardNet ----------------
    hdn = _gelu_exact(jnp.dot(x1, w1_ref[...],
                              preferred_element_type=jnp.float32) + b1)
    y = jnp.dot(hdn, w2_ref[...], preferred_element_type=jnp.float32) + b2 + x1
    y = _layer_norm(y, ln2_g, ln2_b)

    o_ref[...] = y.astype(o_ref.dtype)


def encoder_block(x, mask, params, block_batch=None):
    """x: (B, T, D) f32, mask: (B, 1, T) f32 (0 = masked key).

    block_batch:
      * None (default) -> a single grid step over the whole (B*T, D) slab:
        best on 1-TensorCore chips (v5e / v6e) — no per-grid-step overhead
        and matmul M doubled to B*T rows.
      * 1 -> grid=(B,) with a 'parallel' axis so v7x's two TensorCores each
        process one batch element.
    """
    (wq, bq, wk, bk, wo, bo, g1, be1, w1, b1, w2, b2, g2, be2) = params
    bb = B if block_batch is None else block_batch
    assert B % bb == 0
    nblk = B // bb

    # One-time packing on the host side (constant-folded under jit):
    wqk = jnp.concatenate([wq, wk], axis=1)                           # (D, 2D)
    vecs = jnp.concatenate([bq, bk, bo, g1, be1, g2, be2, b2], axis=0)  # (8, D)
    x2d = x.reshape(B * T, D)                                         # row slab

    full2d = lambda shape: pl.BlockSpec(shape, lambda i: (0, 0))
    out2d = pl.pallas_call(
        encoder_block_kernel,
        out_shape=jax.ShapeDtypeStruct((B * T, D), x.dtype),
        grid=(nblk,),
        in_specs=[
            pl.BlockSpec((bb * T, D), lambda i: (i, 0)),      # x rows
            pl.BlockSpec((bb, 1, T), lambda i: (i, 0, 0)),    # key mask
            full2d((D, 2 * D)),                               # [Wq | Wk]
            full2d((D, D)),                                   # Wo
            full2d((D, HID)),                                 # W1
            full2d((HID, D)),                                 # W2
            full2d((8, D)),                                   # packed biases/LN
            full2d((1, HID)),                                 # b1
        ],
        out_specs=pl.BlockSpec((bb * T, D), lambda i: (i, 0)),
        compiler_params=pltpu.CompilerParams(
            dimension_semantics=("parallel",)),
    )(x2d, mask, wqk, wo, w1, w2, vecs, b1)
    return out2d.reshape(B, T, D)


def encoder_block_ref(x, mask, params):
    """Pure-JAX reference (mirrors the PyTorch forward exactly)."""
    (wq, bq, wk, bk, wo, bo, g1, be1, w1, b1, w2, b2, g2, be2) = params
    residual = x
    q = x @ wq + bq
    k = x @ wk + bk
    v = x @ wk + bk                              # W_k used for V (PyTorch quirk)
    qh = q.reshape(B, T, H, DK).transpose(0, 2, 1, 3)
    kh = k.reshape(B, T, H, DK).transpose(0, 2, 1, 3)
    vh = v.reshape(B, T, H, DK).transpose(0, 2, 1, 3)
    s = jnp.einsum("bhqd,bhkd->bhqk", qh, kh) / math.sqrt(DK)
    s = jnp.where(mask[:, None, :, :] == 0.0, -1e20, s)   # (B,1,1,T) broadcast
    p = jax.nn.softmax(s, axis=-1)
    o = jnp.einsum("bhqk,bhkd->bhqd", p, vh).transpose(0, 2, 1, 3).reshape(B, T, D)
    x1 = o @ wo + bo + residual
    x1 = _layer_norm(x1, g1, be1)
    res2 = x1
    hdn = _gelu_exact(x1 @ w1 + b1)
    y = hdn @ w2 + b2 + res2
    return _layer_norm(y, g2, be2)


def make_params(key):
    ks = jax.random.split(key, 8)
    sc = 0.05
    wq = sc * jax.random.normal(ks[0], (D, D), jnp.float32)
    bq = sc * jax.random.normal(ks[1], (1, D), jnp.float32)
    wk = sc * jax.random.normal(ks[2], (D, D), jnp.float32)
    bk = sc * jax.random.normal(ks[3], (1, D), jnp.float32)
    wo = sc * jax.random.normal(ks[4], (D, D), jnp.float32)
    bo = sc * jax.random.normal(ks[5], (1, D), jnp.float32)
    g1 = jnp.ones((1, D), jnp.float32)
    be1 = jnp.zeros((1, D), jnp.float32)
    w1 = sc * jax.random.normal(ks[6], (D, HID), jnp.float32)
    b1 = jnp.zeros((1, HID), jnp.float32)
    w2 = sc * jax.random.normal(ks[7], (HID, D), jnp.float32)
    b2 = jnp.zeros((1, D), jnp.float32)
    g2 = jnp.ones((1, D), jnp.float32)
    be2 = jnp.zeros((1, D), jnp.float32)
    return (wq, bq, wk, bk, wo, bo, g1, be1, w1, b1, w2, b2, g2, be2)


if __name__ == "__main__":
    key = jax.random.PRNGKey(0)
    kx, kp = jax.random.split(key)
    x = jax.random.normal(kx, (B, T, D), jnp.float32)
    # key mask: last 2 positions of batch element 1 are masked out
    mask = jnp.ones((B, 1, T), jnp.float32).at[1, 0, -2:].set(0.0)
    params = make_params(kp)

    ref = encoder_block_ref(x, mask, params)

    # Tolerance is 1e-3 (not 1e-4) because softmax uses the hardware
    # approximate reciprocal (EUP vrcp, ~2^-12 relative error).
    out = jax.block_until_ready(encoder_block(x, mask, params))
    assert out.shape == (B, T, D)
    assert jnp.allclose(out, ref, rtol=1e-3, atol=1e-3), (
        float(jnp.max(jnp.abs(out - ref))))

    # Per-batch parallel-grid variant (the v7x 2-TensorCore layout).
    out2 = jax.block_until_ready(encoder_block(x, mask, params, block_batch=1))
    assert jnp.allclose(out2, ref, rtol=1e-3, atol=1e-3), (
        float(jnp.max(jnp.abs(out2 - ref))))

    print("KERNEL_OK")
</pallas_src>

<mosaic_0001>
module attributes {stable_mosaic.version = 11 : i64} {
  func.func @encoder_block_kernel(%arg0: i32, %arg1: memref<16x32xf32, #tpu.memory_space<vmem>>, %arg2: memref<2x1x8xf32, #tpu.memory_space<vmem>>, %arg3: memref<32x64xf32, #tpu.memory_space<vmem>>, %arg4: memref<32x32xf32, #tpu.memory_space<vmem>>, %arg5: memref<32x128xf32, #tpu.memory_space<vmem>>, %arg6: memref<128x32xf32, #tpu.memory_space<vmem>>, %arg7: memref<8x32xf32, #tpu.memory_space<vmem>>, %arg8: memref<1x128xf32, #tpu.memory_space<vmem>>, %arg9: memref<16x32xf32, #tpu.memory_space<vmem>>) attributes {dimension_semantics = [#tpu.dimension_semantics<parallel>], iteration_bounds = array<i64: 1>, scalar_prefetch = 0 : i64, scratch_operands = 0 : i64, tpu.core_type = #tpu.core_type<tc>, window_params = [{transform_indices = @transform_0, window_bounds = array<i64: 16, 32>}, {transform_indices = @transform_1, window_bounds = array<i64: 2, 1, 8>}, {pipeline_mode = #tpu.pipeline_mode<synchronous>, transform_indices = @transform_2, window_bounds = array<i64: 32, 64>}, {pipeline_mode = #tpu.pipeline_mode<synchronous>, transform_indices = @transform_3, window_bounds = array<i64: 32, 32>}, {pipeline_mode = #tpu.pipeline_mode<synchronous>, transform_indices = @transform_4, window_bounds = array<i64: 32, 128>}, {pipeline_mode = #tpu.pipeline_mode<synchronous>, transform_indices = @transform_5, window_bounds = array<i64: 128, 32>}, {pipeline_mode = #tpu.pipeline_mode<synchronous>, transform_indices = @transform_6, window_bounds = array<i64: 8, 32>}, {pipeline_mode = #tpu.pipeline_mode<synchronous>, transform_indices = @transform_7, window_bounds = array<i64: 1, 128>}, {transform_indices = @transform_8, window_bounds = array<i64: 16, 32>}]} {
    %c0 = arith.constant 0 : index
    %c0_0 = arith.constant 0 : index
    %0 = vector.load %arg1[%c0, %c0_0] : memref<16x32xf32, #tpu.memory_space<vmem>>, vector<16x32xf32>
    %c0_1 = arith.constant 0 : index
    %c0_2 = arith.constant 0 : index
    %c0_3 = arith.constant 0 : index
    %1 = vector.load %arg2[%c0_1, %c0_2, %c0_3] : memref<2x1x8xf32, #tpu.memory_space<vmem>>, vector<2x1x8xf32>
    %c0_4 = arith.constant 0 : index
    %c0_5 = arith.constant 0 : index
    %2 = vector.load %arg7[%c0_4, %c0_5] : memref<8x32xf32, #tpu.memory_space<vmem>>, vector<8x32xf32>
    %3 = vector.extract_strided_slice %2 {offsets = [0, 0], sizes = [1, 32], strides = [1, 1]} : vector<8x32xf32> to vector<1x32xf32>
    %4 = vector.extract_strided_slice %2 {offsets = [1, 0], sizes = [1, 32], strides = [1, 1]} : vector<8x32xf32> to vector<1x32xf32>
    %5 = vector.extract_strided_slice %2 {offsets = [2, 0], sizes = [1, 32], strides = [1, 1]} : vector<8x32xf32> to vector<1x32xf32>
    %6 = vector.extract_strided_slice %2 {offsets = [3, 0], sizes = [1, 32], strides = [1, 1]} : vector<8x32xf32> to vector<1x32xf32>
    %7 = vector.extract_strided_slice %2 {offsets = [4, 0], sizes = [1, 32], strides = [1, 1]} : vector<8x32xf32> to vector<1x32xf32>
    %8 = vector.extract_strided_slice %2 {offsets = [5, 0], sizes = [1, 32], strides = [1, 1]} : vector<8x32xf32> to vector<1x32xf32>
    %9 = vector.extract_strided_slice %2 {offsets = [6, 0], sizes = [1, 32], strides = [1, 1]} : vector<8x32xf32> to vector<1x32xf32>
    %10 = vector.extract_strided_slice %2 {offsets = [7, 0], sizes = [1, 32], strides = [1, 1]} : vector<8x32xf32> to vector<1x32xf32>
    %c0_6 = arith.constant 0 : index
    %c0_7 = arith.constant 0 : index
    %11 = vector.load %arg8[%c0_6, %c0_7] : memref<1x128xf32, #tpu.memory_space<vmem>>, vector<1x128xf32>
    %c0_8 = arith.constant 0 : index
    %c0_9 = arith.constant 0 : index
    %12 = vector.load %arg4[%c0_8, %c0_9] : memref<32x32xf32, #tpu.memory_space<vmem>>, vector<32x32xf32>
    %c0_10 = arith.constant 0 : index
    %c0_11 = arith.constant 0 : index
    %13 = vector.load %arg3[%c0_10, %c0_11] : memref<32x64xf32, #tpu.memory_space<vmem>>, vector<32x64xf32>
    %cst = arith.constant dense<0.000000e+00> : vector<16x64xf32>
    %14 = tpu.matmul %0, %13, %cst {dimension_numbers = #tpu.dot_dimension_numbers<[1], [0], [0], [1], [0, 0, 1, 1], [], []>} : vector<16x32xf32>, vector<32x64xf32>, vector<16x64xf32> -> vector<16x64xf32>
    %15 = vector.extract_strided_slice %14 {offsets = [0, 0], sizes = [16, 32], strides = [1, 1]} : vector<16x64xf32> to vector<16x32xf32>
    %16 = vector.broadcast %3 : vector<1x32xf32> to vector<16x32xf32>
    %17 = arith.addf %15, %16 : vector<16x32xf32>
    %cst_12 = arith.constant 0.353553385 : f32
    %18 = vector.broadcast %cst_12 : f32 to vector<16x32xf32>
    %19 = arith.mulf %17, %18 : vector<16x32xf32>
    %20 = vector.extract_strided_slice %14 {offsets = [0, 32], sizes = [16, 32], strides = [1, 1]} : vector<16x64xf32> to vector<16x32xf32>
    %21 = vector.broadcast %4 : vector<1x32xf32> to vector<16x32xf32>
    %22 = arith.addf %20, %21 : vector<16x32xf32>
    %cst_13 = arith.constant 0.000000e+00 : f32
    %23 = vector.broadcast %cst_13 : f32 to vector<2x1x8xf32>
    %24 = arith.cmpf oeq, %1, %23 : vector<2x1x8xf32>
    %cst_14 = arith.constant -1.000000e+20 : f32
    %cst_15 = arith.constant 0.000000e+00 : f32
    %25 = vector.broadcast %cst_14 : f32 to vector<2x1x8xf32>
    %26 = vector.broadcast %cst_15 : f32 to vector<2x1x8xf32>
    %27 = arith.select %24, %25, %26 : vector<2x1x8xi1>, vector<2x1x8xf32>
    %28 = vector.extract_strided_slice %19 {offsets = [0, 0], sizes = [8, 32], strides = [1, 1]} : vector<16x32xf32> to vector<8x32xf32>
    %29 = vector.extract_strided_slice %22 {offsets = [0, 0], sizes = [8, 32], strides = [1, 1]} : vector<16x32xf32> to vector<8x32xf32>
    %30 = vector.extract_strided_slice %27 {offsets = [0, 0, 0], sizes = [1, 1, 8], strides = [1, 1, 1]} : vector<2x1x8xf32> to vector<1x1x8xf32>
    %31 = vector.shape_cast %30 : vector<1x1x8xf32> to vector<1x8xf32>
    %cst_16 = arith.constant 0.000000e+00 : f32
    %32 = vector.broadcast %cst_16 : f32 to vector<8x32xf32>
    %33 = vector.extract_strided_slice %28 {offsets = [0, 0], sizes = [8, 8], strides = [1, 1]} : vector<8x32xf32> to vector<8x8xf32>
    %34 = vector.extract_strided_slice %29 {offsets = [0, 0], sizes = [8, 8], strides = [1, 1]} : vector<8x32xf32> to vector<8x8xf32>
    %cst_17 = arith.constant dense<0.000000e+00> : vector<8x8xf32>
    %35 = tpu.matmul %33, %34, %cst_17 {dimension_numbers = #tpu.dot_dimension_numbers<[1], [1], [0], [0], [0, 0, 1, 0], [], []>} : vector<8x8xf32>, vector<8x8xf32>, vector<8x8xf32> -> vector<8x8xf32>
    %36 = vector.broadcast %31 : vector<1x8xf32> to vector<8x8xf32>
    %37 = arith.addf %35, %36 : vector<8x8xf32>
    %cst_18 = arith.constant dense<0xFF800000> : vector<8xf32>
    %38 = vector.multi_reduction <maximumf>, %37, %cst_18 [1] : vector<8x8xf32> to vector<8xf32>
    %39 = vector.shape_cast %38 : vector<8xf32> to vector<8x1xf32>
    %40 = vector.broadcast %39 : vector<8x1xf32> to vector<8x8xf32>
    %41 = arith.subf %37, %40 : vector<8x8xf32>
    %42 = math.exp %41 : vector<8x8xf32>
    %cst_19 = arith.constant dense<0.000000e+00> : vector<8xf32>
    %43 = vector.multi_reduction <add>, %42, %cst_19 [1] : vector<8x8xf32> to vector<8xf32>
    %44 = vector.shape_cast %43 : vector<8xf32> to vector<8x1xf32>
    %45 = tpu.reciprocal %44 {approx = true} : vector<8x1xf32> -> vector<8x1xf32>
    %46 = vector.broadcast %45 : vector<8x1xf32> to vector<8x8xf32>
    %47 = arith.mulf %42, %46 : vector<8x8xf32>
    %48 = vector.extract_strided_slice %29 {offsets = [0, 0], sizes = [8, 8], strides = [1, 1]} : vector<8x32xf32> to vector<8x8xf32>
    %cst_20 = arith.constant dense<0.000000e+00> : vector<8x8xf32>
    %49 = tpu.matmul %47, %48, %cst_20 {dimension_numbers = #tpu.dot_dimension_numbers<[1], [0], [0], [1], [0, 0, 1, 1], [], []>} : vector<8x8xf32>, vector<8x8xf32>, vector<8x8xf32> -> vector<8x8xf32>
    %50 = vector.extract_strided_slice %12 {offsets = [0, 0], sizes = [8, 32], strides = [1, 1]} : vector<32x32xf32> to vector<8x32xf32>
    %cst_21 = arith.constant dense<0.000000e+00> : vector<8x32xf32>
    %51 = tpu.matmul %49, %50, %cst_21 {dimension_numbers = #tpu.dot_dimension_numbers<[1], [0], [0], [1], [0, 0, 1, 1], [], []>} : vector<8x8xf32>, vector<8x32xf32>, vector<8x32xf32> -> vector<8x32xf32>
    %52 = arith.addf %32, %51 : vector<8x32xf32>
    %53 = vector.extract_strided_slice %28 {offsets = [0, 8], sizes = [8, 8], strides = [1, 1]} : vector<8x32xf32> to vector<8x8xf32>
    %54 = vector.extract_strided_slice %29 {offsets = [0, 8], sizes = [8, 8], strides = [1, 1]} : vector<8x32xf32> to vector<8x8xf32>
    %cst_22 = arith.constant dense<0.000000e+00> : vector<8x8xf32>
    %55 = tpu.matmul %53, %54, %cst_22 {dimension_numbers = #tpu.dot_dimension_numbers<[1], [1], [0], [0], [0, 0, 1, 0], [], []>} : vector<8x8xf32>, vector<8x8xf32>, vector<8x8xf32> -> vector<8x8xf32>
    %56 = vector.broadcast %31 : vector<1x8xf32> to vector<8x8xf32>
    %57 = arith.addf %55, %56 : vector<8x8xf32>
    %cst_23 = arith.constant dense<0xFF800000> : vector<8xf32>
    %58 = vector.multi_reduction <maximumf>, %57, %cst_23 [1] : vector<8x8xf32> to vector<8xf32>
    %59 = vector.shape_cast %58 : vector<8xf32> to vector<8x1xf32>
    %60 = vector.broadcast %59 : vector<8x1xf32> to vector<8x8xf32>
    %61 = arith.subf %57, %60 : vector<8x8xf32>
    %62 = math.exp %61 : vector<8x8xf32>
    %cst_24 = arith.constant dense<0.000000e+00> : vector<8xf32>
    %63 = vector.multi_reduction <add>, %62, %cst_24 [1] : vector<8x8xf32> to vector<8xf32>
    %64 = vector.shape_cast %63 : vector<8xf32> to vector<8x1xf32>
    %65 = tpu.reciprocal %64 {approx = true} : vector<8x1xf32> -> vector<8x1xf32>
    %66 = vector.broadcast %65 : vector<8x1xf32> to vector<8x8xf32>
    %67 = arith.mulf %62, %66 : vector<8x8xf32>
    %68 = vector.extract_strided_slice %29 {offsets = [0, 8], sizes = [8, 8], strides = [1, 1]} : vector<8x32xf32> to vector<8x8xf32>
    %cst_25 = arith.constant dense<0.000000e+00> : vector<8x8xf32>
    %69 = tpu.matmul %67, %68, %cst_25 {dimension_numbers = #tpu.dot_dimension_numbers<[1], [0], [0], [1], [0, 0, 1, 1], [], []>} : vector<8x8xf32>, vector<8x8xf32>, vector<8x8xf32> -> vector<8x8xf32>
    %70 = vector.extract_strided_slice %12 {offsets = [8, 0], sizes = [8, 32], strides = [1, 1]} : vector<32x32xf32> to vector<8x32xf32>
    %cst_26 = arith.constant dense<0.000000e+00> : vector<8x32xf32>
    %71 = tpu.matmul %69, %70, %cst_26 {dimension_numbers = #tpu.dot_dimension_numbers<[1], [0], [0], [1], [0, 0, 1, 1], [], []>} : vector<8x8xf32>, vector<8x32xf32>, vector<8x32xf32> -> vector<8x32xf32>
    %72 = arith.addf %52, %71 : vector<8x32xf32>
    %73 = vector.extract_strided_slice %28 {offsets = [0, 16], sizes = [8, 8], strides = [1, 1]} : vector<8x32xf32> to vector<8x8xf32>
    %74 = vector.extract_strided_slice %29 {offsets = [0, 16], sizes = [8, 8], strides = [1, 1]} : vector<8x32xf32> to vector<8x8xf32>
    %cst_27 = arith.constant dense<0.000000e+00> : vector<8x8xf32>
    %75 = tpu.matmul %73, %74, %cst_27 {dimension_numbers = #tpu.dot_dimension_numbers<[1], [1], [0], [0], [0, 0, 1, 0], [], []>} : vector<8x8xf32>, vector<8x8xf32>, vector<8x8xf32> -> vector<8x8xf32>
    %76 = vector.broadcast %31 : vector<1x8xf32> to vector<8x8xf32>
    %77 = arith.addf %75, %76 : vector<8x8xf32>
    %cst_28 = arith.constant dense<0xFF800000> : vector<8xf32>
    %78 = vector.multi_reduction <maximumf>, %77, %cst_28 [1] : vector<8x8xf32> to vector<8xf32>
    %79 = vector.shape_cast %78 : vector<8xf32> to vector<8x1xf32>
    %80 = vector.broadcast %79 : vector<8x1xf32> to vector<8x8xf32>
    %81 = arith.subf %77, %80 : vector<8x8xf32>
    %82 = math.exp %81 : vector<8x8xf32>
    %cst_29 = arith.constant dense<0.000000e+00> : vector<8xf32>
    %83 = vector.multi_reduction <add>, %82, %cst_29 [1] : vector<8x8xf32> to vector<8xf32>
    %84 = vector.shape_cast %83 : vector<8xf32> to vector<8x1xf32>
    %85 = tpu.reciprocal %84 {approx = true} : vector<8x1xf32> -> vector<8x1xf32>
    %86 = vector.broadcast %85 : vector<8x1xf32> to vector<8x8xf32>
    %87 = arith.mulf %82, %86 : vector<8x8xf32>
    %88 = vector.extract_strided_slice %29 {offsets = [0, 16], sizes = [8, 8], strides = [1, 1]} : vector<8x32xf32> to vector<8x8xf32>
    %cst_30 = arith.constant dense<0.000000e+00> : vector<8x8xf32>
    %89 = tpu.matmul %87, %88, %cst_30 {dimension_numbers = #tpu.dot_dimension_numbers<[1], [0], [0], [1], [0, 0, 1, 1], [], []>} : vector<8x8xf32>, vector<8x8xf32>, vector<8x8xf32> -> vector<8x8xf32>
    %90 = vector.extract_strided_slice %12 {offsets = [16, 0], sizes = [8, 32], strides = [1, 1]} : vector<32x32xf32> to vector<8x32xf32>
    %cst_31 = arith.constant dense<0.000000e+00> : vector<8x32xf32>
    %91 = tpu.matmul %89, %90, %cst_31 {dimension_numbers = #tpu.dot_dimension_numbers<[1], [0], [0], [1], [0, 0, 1, 1], [], []>} : vector<8x8xf32>, vector<8x32xf32>, vector<8x32xf32> -> vector<8x32xf32>
    %92 = arith.addf %72, %91 : vector<8x32xf32>
    %93 = vector.extract_strided_slice %28 {offsets = [0, 24], sizes = [8, 8], strides = [1, 1]} : vector<8x32xf32> to vector<8x8xf32>
    %94 = vector.extract_strided_slice %29 {offsets = [0, 24], sizes = [8, 8], strides = [1, 1]} : vector<8x32xf32> to vector<8x8xf32>
    %cst_32 = arith.constant dense<0.000000e+00> : vector<8x8xf32>
    %95 = tpu.matmul %93, %94, %cst_32 {dimension_numbers = #tpu.dot_dimension_numbers<[1], [1], [0], [0], [0, 0, 1, 0], [], []>} : vector<8x8xf32>, vector<8x8xf32>, vector<8x8xf32> -> vector<8x8xf32>
    %96 = vector.broadcast %31 : vector<1x8xf32> to vector<8x8xf32>
    %97 = arith.addf %95, %96 : vector<8x8xf32>
    %cst_33 = arith.constant dense<0xFF800000> : vector<8xf32>
    %98 = vector.multi_reduction <maximumf>, %97, %cst_33 [1] : vector<8x8xf32> to vector<8xf32>
    %99 = vector.shape_cast %98 : vector<8xf32> to vector<8x1xf32>
    %100 = vector.broadcast %99 : vector<8x1xf32> to vector<8x8xf32>
    %101 = arith.subf %97, %100 : vector<8x8xf32>
    %102 = math.exp %101 : vector<8x8xf32>
    %cst_34 = arith.constant dense<0.000000e+00> : vector<8xf32>
    %103 = vector.multi_reduction <add>, %102, %cst_34 [1] : vector<8x8xf32> to vector<8xf32>
    %104 = vector.shape_cast %103 : vector<8xf32> to vector<8x1xf32>
    %105 = tpu.reciprocal %104 {approx = true} : vector<8x1xf32> -> vector<8x1xf32>
    %106 = vector.broadcast %105 : vector<8x1xf32> to vector<8x8xf32>
    %107 = arith.mulf %102, %106 : vector<8x8xf32>
    %108 = vector.extract_strided_slice %29 {offsets = [0, 24], sizes = [8, 8], strides = [1, 1]} : vector<8x32xf32> to vector<8x8xf32>
    %cst_35 = arith.constant dense<0.000000e+00> : vector<8x8xf32>
    %109 = tpu.matmul %107, %108, %cst_35 {dimension_numbers = #tpu.dot_dimension_numbers<[1], [0], [0], [1], [0, 0, 1, 1], [], []>} : vector<8x8xf32>, vector<8x8xf32>, vector<8x8xf32> -> vector<8x8xf32>
    %110 = vector.extract_strided_slice %12 {offsets = [24, 0], sizes = [8, 32], strides = [1, 1]} : vector<32x32xf32> to vector<8x32xf32>
    %cst_36 = arith.constant dense<0.000000e+00> : vector<8x32xf32>
    %111 = tpu.matmul %109, %110, %cst_36 {dimension_numbers = #tpu.dot_dimension_numbers<[1], [0], [0], [1], [0, 0, 1, 1], [], []>} : vector<8x8xf32>, vector<8x32xf32>, vector<8x32xf32> -> vector<8x32xf32>
    %112 = arith.addf %92, %111 : vector<8x32xf32>
    %113 = vector.extract_strided_slice %19 {offsets = [8, 0], sizes = [8, 32], strides = [1, 1]} : vector<16x32xf32> to vector<8x32xf32>
    %114 = vector.extract_strided_slice %22 {offsets = [8, 0], sizes = [8, 32], strides = [1, 1]} : vector<16x32xf32> to vector<8x32xf32>
    %115 = vector.extract_strided_slice %27 {offsets = [1, 0, 0], sizes = [1, 1, 8], strides = [1, 1, 1]} : vector<2x1x8xf32> to vector<1x1x8xf32>
    %116 = vector.shape_cast %115 : vector<1x1x8xf32> to vector<1x8xf32>
    %cst_37 = arith.constant 0.000000e+00 : f32
    %117 = vector.broadcast %cst_37 : f32 to vector<8x32xf32>
    %118 = vector.extract_strided_slice %113 {offsets = [0, 0], sizes = [8, 8], strides = [1, 1]} : vector<8x32xf32> to vector<8x8xf32>
    %119 = vector.extract_strided_slice %114 {offsets = [0, 0], sizes = [8, 8], strides = [1, 1]} : vector<8x32xf32> to vector<8x8xf32>
    %cst_38 = arith.constant dense<0.000000e+00> : vector<8x8xf32>
    %120 = tpu.matmul %118, %119, %cst_38 {dimension_numbers = #tpu.dot_dimension_numbers<[1], [1], [0], [0], [0, 0, 1, 0], [], []>} : vector<8x8xf32>, vector<8x8xf32>, vector<8x8xf32> -> vector<8x8xf32>
    %121 = vector.broadcast %116 : vector<1x8xf32> to vector<8x8xf32>
    %122 = arith.addf %120, %121 : vector<8x8xf32>
    %cst_39 = arith.constant dense<0xFF800000> : vector<8xf32>
    %123 = vector.multi_reduction <maximumf>, %122, %cst_39 [1] : vector<8x8xf32> to vector<8xf32>
    %124 = vector.shape_cast %123 : vector<8xf32> to vector<8x1xf32>
    %125 = vector.broadcast %124 : vector<8x1xf32> to vector<8x8xf32>
    %126 = arith.subf %122, %125 : vector<8x8xf32>
    %127 = math.exp %126 : vector<8x8xf32>
    %cst_40 = arith.constant dense<0.000000e+00> : vector<8xf32>
    %128 = vector.multi_reduction <add>, %127, %cst_40 [1] : vector<8x8xf32> to vector<8xf32>
    %129 = vector.shape_cast %128 : vector<8xf32> to vector<8x1xf32>
    %130 = tpu.reciprocal %129 {approx = true} : vector<8x1xf32> -> vector<8x1xf32>
    %131 = vector.broadcast %130 : vector<8x1xf32> to vector<8x8xf32>
    %132 = arith.mulf %127, %131 : vector<8x8xf32>
    %133 = vector.extract_strided_slice %114 {offsets = [0, 0], sizes = [8, 8], strides = [1, 1]} : vector<8x32xf32> to vector<8x8xf32>
    %cst_41 = arith.constant dense<0.000000e+00> : vector<8x8xf32>
    %134 = tpu.matmul %132, %133, %cst_41 {dimension_numbers = #tpu.dot_dimension_numbers<[1], [0], [0], [1], [0, 0, 1, 1], [], []>} : vector<8x8xf32>, vector<8x8xf32>, vector<8x8xf32> -> vector<8x8xf32>
    %135 = vector.extract_strided_slice %12 {offsets = [0, 0], sizes = [8, 32], strides = [1, 1]} : vector<32x32xf32> to vector<8x32xf32>
    %cst_42 = arith.constant dense<0.000000e+00> : vector<8x32xf32>
    %136 = tpu.matmul %134, %135, %cst_42 {dimension_numbers = #tpu.dot_dimension_numbers<[1], [0], [0], [1], [0, 0, 1, 1], [], []>} : vector<8x8xf32>, vector<8x32xf32>, vector<8x32xf32> -> vector<8x32xf32>
    %137 = arith.addf %117, %136 : vector<8x32xf32>
    %138 = vector.extract_strided_slice %113 {offsets = [0, 8], sizes = [8, 8], strides = [1, 1]} : vector<8x32xf32> to vector<8x8xf32>
    %139 = vector.extract_strided_slice %114 {offsets = [0, 8], sizes = [8, 8], strides = [1, 1]} : vector<8x32xf32> to vector<8x8xf32>
    %cst_43 = arith.constant dense<0.000000e+00> : vector<8x8xf32>
    %140 = tpu.matmul %138, %139, %cst_43 {dimension_numbers = #tpu.dot_dimension_numbers<[1], [1], [0], [0], [0, 0, 1, 0], [], []>} : vector<8x8xf32>, vector<8x8xf32>, vector<8x8xf32> -> vector<8x8xf32>
    %141 = vector.broadcast %116 : vector<1x8xf32> to vector<8x8xf32>
    %142 = arith.addf %140, %141 : vector<8x8xf32>
    %cst_44 = arith.constant dense<0xFF800000> : vector<8xf32>
    %143 = vector.multi_reduction <maximumf>, %142, %cst_44 [1] : vector<8x8xf32> to vector<8xf32>
    %144 = vector.shape_cast %143 : vector<8xf32> to vector<8x1xf32>
    %145 = vector.broadcast %144 : vector<8x1xf32> to vector<8x8xf32>
    %146 = arith.subf %142, %145 : vector<8x8xf32>
    %147 = math.exp %146 : vector<8x8xf32>
    %cst_45 = arith.constant dense<0.000000e+00> : vector<8xf32>
    %148 = vector.multi_reduction <add>, %147, %cst_45 [1] : vector<8x8xf32> to vector<8xf32>
    %149 = vector.shape_cast %148 : vector<8xf32> to vector<8x1xf32>
    %150 = tpu.reciprocal %149 {approx = true} : vector<8x1xf32> -> vector<8x1xf32>
    %151 = vector.broadcast %150 : vector<8x1xf32> to vector<8x8xf32>
    %152 = arith.mulf %147, %151 : vector<8x8xf32>
    %153 = vector.extract_strided_slice %114 {offsets = [0, 8], sizes = [8, 8], strides = [1, 1]} : vector<8x32xf32> to vector<8x8xf32>
    %cst_46 = arith.constant dense<0.000000e+00> : vector<8x8xf32>
    %154 = tpu.matmul %152, %153, %cst_46 {dimension_numbers = #tpu.dot_dimension_numbers<[1], [0], [0], [1], [0, 0, 1, 1], [], []>} : vector<8x8xf32>, vector<8x8xf32>, vector<8x8xf32> -> vector<8x8xf32>
    %155 = vector.extract_strided_slice %12 {offsets = [8, 0], sizes = [8, 32], strides = [1, 1]} : vector<32x32xf32> to vector<8x32xf32>
    %cst_47 = arith.constant dense<0.000000e+00> : vector<8x32xf32>
    %156 = tpu.matmul %154, %155, %cst_47 {dimension_numbers = #tpu.dot_dimension_numbers<[1], [0], [0], [1], [0, 0, 1, 1], [], []>} : vector<8x8xf32>, vector<8x32xf32>, vector<8x32xf32> -> vector<8x32xf32>
    %157 = arith.addf %137, %156 : vector<8x32xf32>
    %158 = vector.extract_strided_slice %113 {offsets = [0, 16], sizes = [8, 8], strides = [1, 1]} : vector<8x32xf32> to vector<8x8xf32>
    %159 = vector.extract_strided_slice %114 {offsets = [0, 16], sizes = [8, 8], strides = [1, 1]} : vector<8x32xf32> to vector<8x8xf32>
    %cst_48 = arith.constant dense<0.000000e+00> : vector<8x8xf32>
    %160 = tpu.matmul %158, %159, %cst_48 {dimension_numbers = #tpu.dot_dimension_numbers<[1], [1], [0], [0], [0, 0, 1, 0], [], []>} : vector<8x8xf32>, vector<8x8xf32>, vector<8x8xf32> -> vector<8x8xf32>
    %161 = vector.broadcast %116 : vector<1x8xf32> to vector<8x8xf32>
    %162 = arith.addf %160, %161 : vector<8x8xf32>
    %cst_49 = arith.constant dense<0xFF800000> : vector<8xf32>
    %163 = vector.multi_reduction <maximumf>, %162, %cst_49 [1] : vector<8x8xf32> to vector<8xf32>
    %164 = vector.shape_cast %163 : vector<8xf32> to vector<8x1xf32>
    %165 = vector.broadcast %164 : vector<8x1xf32> to vector<8x8xf32>
    %166 = arith.subf %162, %165 : vector<8x8xf32>
    %167 = math.exp %166 : vector<8x8xf32>
    %cst_50 = arith.constant dense<0.000000e+00> : vector<8xf32>
    %168 = vector.multi_reduction <add>, %167, %cst_50 [1] : vector<8x8xf32> to vector<8xf32>
    %169 = vector.shape_cast %168 : vector<8xf32> to vector<8x1xf32>
    %170 = tpu.reciprocal %169 {approx = true} : vector<8x1xf32> -> vector<8x1xf32>
    %171 = vector.broadcast %170 : vector<8x1xf32> to vector<8x8xf32>
    %172 = arith.mulf %167, %171 : vector<8x8xf32>
    %173 = vector.extract_strided_slice %114 {offsets = [0, 16], sizes = [8, 8], strides = [1, 1]} : vector<8x32xf32> to vector<8x8xf32>
    %cst_51 = arith.constant dense<0.000000e+00> : vector<8x8xf32>
    %174 = tpu.matmul %172, %173, %cst_51 {dimension_numbers = #tpu.dot_dimension_numbers<[1], [0], [0], [1], [0, 0, 1, 1], [], []>} : vector<8x8xf32>, vector<8x8xf32>, vector<8x8xf32> -> vector<8x8xf32>
    %175 = vector.extract_strided_slice %12 {offsets = [16, 0], sizes = [8, 32], strides = [1, 1]} : vector<32x32xf32> to vector<8x32xf32>
    %cst_52 = arith.constant dense<0.000000e+00> : vector<8x32xf32>
    %176 = tpu.matmul %174, %175, %cst_52 {dimension_numbers = #tpu.dot_dimension_numbers<[1], [0], [0], [1], [0, 0, 1, 1], [], []>} : vector<8x8xf32>, vector<8x32xf32>, vector<8x32xf32> -> vector<8x32xf32>
    %177 = arith.addf %157, %176 : vector<8x32xf32>
    %178 = vector.extract_strided_slice %113 {offsets = [0, 24], sizes = [8, 8], strides = [1, 1]} : vector<8x32xf32> to vector<8x8xf32>
    %179 = vector.extract_strided_slice %114 {offsets = [0, 24], sizes = [8, 8], strides = [1, 1]} : vector<8x32xf32> to vector<8x8xf32>
    %cst_53 = arith.constant dense<0.000000e+00> : vector<8x8xf32>
    %180 = tpu.matmul %178, %179, %cst_53 {dimension_numbers = #tpu.dot_dimension_numbers<[1], [1], [0], [0], [0, 0, 1, 0], [], []>} : vector<8x8xf32>, vector<8x8xf32>, vector<8x8xf32> -> vector<8x8xf32>
    %181 = vector.broadcast %116 : vector<1x8xf32> to vector<8x8xf32>
    %182 = arith.addf %180, %181 : vector<8x8xf32>
    %cst_54 = arith.constant dense<0xFF800000> : vector<8xf32>
    %183 = vector.multi_reduction <maximumf>, %182, %cst_54 [1] : vector<8x8xf32> to vector<8xf32>
    %184 = vector.shape_cast %183 : vector<8xf32> to vector<8x1xf32>
    %185 = vector.broadcast %184 : vector<8x1xf32> to vector<8x8xf32>
    %186 = arith.subf %182, %185 : vector<8x8xf32>
    %187 = math.exp %186 : vector<8x8xf32>
    %cst_55 = arith.constant dense<0.000000e+00> : vector<8xf32>
    %188 = vector.multi_reduction <add>, %187, %cst_55 [1] : vector<8x8xf32> to vector<8xf32>
    %189 = vector.shape_cast %188 : vector<8xf32> to vector<8x1xf32>
    %190 = tpu.reciprocal %189 {approx = true} : vector<8x1xf32> -> vector<8x1xf32>
    %191 = vector.broadcast %190 : vector<8x1xf32> to vector<8x8xf32>
    %192 = arith.mulf %187, %191 : vector<8x8xf32>
    %193 = vector.extract_strided_slice %114 {offsets = [0, 24], sizes = [8, 8], strides = [1, 1]} : vector<8x32xf32> to vector<8x8xf32>
    %cst_56 = arith.constant dense<0.000000e+00> : vector<8x8xf32>
    %194 = tpu.matmul %192, %193, %cst_56 {dimension_numbers = #tpu.dot_dimension_numbers<[1], [0], [0], [1], [0, 0, 1, 1], [], []>} : vector<8x8xf32>, vector<8x8xf32>, vector<8x8xf32> -> vector<8x8xf32>
    %195 = vector.extract_strided_slice %12 {offsets = [24, 0], sizes = [8, 32], strides = [1, 1]} : vector<32x32xf32> to vector<8x32xf32>
    %cst_57 = arith.constant dense<0.000000e+00> : vector<8x32xf32>
    %196 = tpu.matmul %194, %195, %cst_57 {dimension_numbers = #tpu.dot_dimension_numbers<[1], [0], [0], [1], [0, 0, 1, 1], [], []>} : vector<8x8xf32>, vector<8x32xf32>, vector<8x32xf32> -> vector<8x32xf32>
    %197 = arith.addf %177, %196 : vector<8x32xf32>
    %198 = tpu.concatenate %112, %197 in 0 : vector<8x32xf32>, vector<8x32xf32> -> vector<16x32xf32>
    %199 = vector.broadcast %5 : vector<1x32xf32> to vector<16x32xf32>
    %200 = arith.addf %198, %199 : vector<16x32xf32>
    %201 = arith.addf %200, %0 : vector<16x32xf32>
    %cst_58 = arith.constant dense<0.000000e+00> : vector<16xf32>
    %202 = vector.multi_reduction <add>, %201, %cst_58 [1] : vector<16x32xf32> to vector<16xf32>
    %203 = vector.shape_cast %202 : vector<16xf32> to vector<16x1xf32>
    %cst_59 = arith.constant 3.200000e+01 : f32
    %204 = vector.broadcast %cst_59 : f32 to vector<16x1xf32>
    %205 = arith.divf %203, %204 : vector<16x1xf32>
    %206 = vector.broadcast %205 : vector<16x1xf32> to vector<16x32xf32>
    %207 = arith.subf %201, %206 : vector<16x32xf32>
    %208 = vector.broadcast %205 : vector<16x1xf32> to vector<16x32xf32>
    %209 = arith.subf %201, %208 : vector<16x32xf32>
    %210 = arith.mulf %207, %209 : vector<16x32xf32>
    %cst_60 = arith.constant dense<0.000000e+00> : vector<16xf32>
    %211 = vector.multi_reduction <add>, %210, %cst_60 [1] : vector<16x32xf32> to vector<16xf32>
    %212 = vector.shape_cast %211 : vector<16xf32> to vector<16x1xf32>
    %cst_61 = arith.constant 3.200000e+01 : f32
    %213 = vector.broadcast %cst_61 : f32 to vector<16x1xf32>
    %214 = arith.divf %212, %213 : vector<16x1xf32>
    %215 = vector.broadcast %205 : vector<16x1xf32> to vector<16x32xf32>
    %216 = arith.subf %201, %215 : vector<16x32xf32>
    %cst_62 = arith.constant 9.99999974E-6 : f32
    %217 = vector.broadcast %cst_62 : f32 to vector<16x1xf32>
    %218 = arith.addf %214, %217 : vector<16x1xf32>
    %219 = math.rsqrt %218 : vector<16x1xf32>
    %220 = vector.broadcast %219 : vector<16x1xf32> to vector<16x32xf32>
    %221 = arith.mulf %216, %220 : vector<16x32xf32>
    %222 = vector.broadcast %6 : vector<1x32xf32> to vector<16x32xf32>
    %223 = arith.mulf %221, %222 : vector<16x32xf32>
    %224 = vector.broadcast %7 : vector<1x32xf32> to vector<16x32xf32>
    %225 = arith.addf %223, %224 : vector<16x32xf32>
    %c0_63 = arith.constant 0 : index
    %c0_64 = arith.constant 0 : index
    %226 = vector.load %arg5[%c0_63, %c0_64] : memref<32x128xf32, #tpu.memory_space<vmem>>, vector<32x128xf32>
    %cst_65 = arith.constant dense<0.000000e+00> : vector<16x128xf32>
    %227 = tpu.matmul %225, %226, %cst_65 {dimension_numbers = #tpu.dot_dimension_numbers<[1], [0], [0], [1], [0, 0, 1, 1], [], []>} : vector<16x32xf32>, vector<32x128xf32>, vector<16x128xf32> -> vector<16x128xf32>
    %228 = vector.broadcast %11 : vector<1x128xf32> to vector<16x128xf32>
    %229 = arith.addf %227, %228 : vector<16x128xf32>
    %cst_66 = arith.constant 5.000000e-01 : f32
    %230 = vector.broadcast %cst_66 : f32 to vector<16x128xf32>
    %231 = arith.mulf %230, %229 : vector<16x128xf32>
    %cst_67 = arith.constant 1.41421354 : f32
    %232 = vector.broadcast %cst_67 : f32 to vector<16x128xf32>
    %233 = arith.divf %229, %232 : vector<16x128xf32>
    %234 = math.erf %233 : vector<16x128xf32>
    %cst_68 = arith.constant 1.000000e+00 : f32
    %235 = vector.broadcast %cst_68 : f32 to vector<16x128xf32>
    %236 = arith.addf %235, %234 : vector<16x128xf32>
    %237 = arith.mulf %231, %236 : vector<16x128xf32>
    %c0_69 = arith.constant 0 : index
    %c0_70 = arith.constant 0 : index
    %238 = vector.load %arg6[%c0_69, %c0_70] : memref<128x32xf32, #tpu.memory_space<vmem>>, vector<128x32xf32>
    %cst_71 = arith.constant dense<0.000000e+00> : vector<16x32xf32>
    %239 = tpu.matmul %237, %238, %cst_71 {dimension_numbers = #tpu.dot_dimension_numbers<[1], [0], [0], [1], [0, 0, 1, 1], [], []>} : vector<16x128xf32>, vector<128x32xf32>, vector<16x32xf32> -> vector<16x32xf32>
    %240 = vector.broadcast %10 : vector<1x32xf32> to vector<16x32xf32>
    %241 = arith.addf %239, %240 : vector<16x32xf32>
    %242 = arith.addf %241, %225 : vector<16x32xf32>
    %cst_72 = arith.constant dense<0.000000e+00> : vector<16xf32>
    %243 = vector.multi_reduction <add>, %242, %cst_72 [1] : vector<16x32xf32> to vector<16xf32>
    %244 = vector.shape_cast %243 : vector<16xf32> to vector<16x1xf32>
    %cst_73 = arith.constant 3.200000e+01 : f32
    %245 = vector.broadcast %cst_73 : f32 to vector<16x1xf32>
    %246 = arith.divf %244, %245 : vector<16x1xf32>
    %247 = vector.broadcast %246 : vector<16x1xf32> to vector<16x32xf32>
    %248 = arith.subf %242, %247 : vector<16x32xf32>
    %249 = vector.broadcast %246 : vector<16x1xf32> to vector<16x32xf32>
    %250 = arith.subf %242, %249 : vector<16x32xf32>
    %251 = arith.mulf %248, %250 : vector<16x32xf32>
    %cst_74 = arith.constant dense<0.000000e+00> : vector<16xf32>
    %252 = vector.multi_reduction <add>, %251, %cst_74 [1] : vector<16x32xf32> to vector<16xf32>
    %253 = vector.shape_cast %252 : vector<16xf32> to vector<16x1xf32>
    %cst_75 = arith.constant 3.200000e+01 : f32
    %254 = vector.broadcast %cst_75 : f32 to vector<16x1xf32>
    %255 = arith.divf %253, %254 : vector<16x1xf32>
    %256 = vector.broadcast %246 : vector<16x1xf32> to vector<16x32xf32>
    %257 = arith.subf %242, %256 : vector<16x32xf32>
    %cst_76 = arith.constant 9.99999974E-6 : f32
    %258 = vector.broadcast %cst_76 : f32 to vector<16x1xf32>
    %259 = arith.addf %255, %258 : vector<16x1xf32>
    %260 = math.rsqrt %259 : vector<16x1xf32>
    %261 = vector.broadcast %260 : vector<16x1xf32> to vector<16x32xf32>
    %262 = arith.mulf %257, %261 : vector<16x32xf32>
    %263 = vector.broadcast %8 : vector<1x32xf32> to vector<16x32xf32>
    %264 = arith.mulf %262, %263 : vector<16x32xf32>
    %265 = vector.broadcast %9 : vector<1x32xf32> to vector<16x32xf32>
    %266 = arith.addf %264, %265 : vector<16x32xf32>
    %c0_77 = arith.constant 0 : index
    %c0_78 = arith.constant 0 : index
    %267 = vector.load %arg9[%c0_77, %c0_78] : memref<16x32xf32, #tpu.memory_space<vmem>>, vector<16x32xf32>
    tpu.vector_store %arg9[%c0_77, %c0_78], %266 {strides = array<i32>} : memref<16x32xf32, #tpu.memory_space<vmem>>, vector<16x32xf32>,
    return
  }
  func.func @transform_0(%arg0: i32) -> (i32, i32) {
    %c0_i32 = arith.constant 0 : i32
    %c0_i32_0 = arith.constant 0 : i32
    return %arg0, %c0_i32 : i32, i32
  }
  func.func @transform_1(%arg0: i32) -> (i32, i32, i32) {
    %c0_i32 = arith.constant 0 : i32
    %c0_i32_0 = arith.constant 0 : i32
    %c0_i32_1 = arith.constant 0 : i32
    return %arg0, %c0_i32, %c0_i32_0 : i32, i32, i32
  }
  func.func @transform_2(%arg0: i32) -> (i32, i32) {
    %c0_i32 = arith.constant 0 : i32
    %c0_i32_0 = arith.constant 0 : i32
    %c0_i32_1 = arith.constant 0 : i32
    return %c0_i32, %c0_i32_0 : i32, i32
  }
  func.func @transform_3(%arg0: i32) -> (i32, i32) {
    %c0_i32 = arith.constant 0 : i32
    %c0_i32_0 = arith.constant 0 : i32
    %c0_i32_1 = arith.constant 0 : i32
    return %c0_i32, %c0_i32_0 : i32, i32
  }
  func.func @transform_4(%arg0: i32) -> (i32, i32) {
    %c0_i32 = arith.constant 0 : i32
    %c0_i32_0 = arith.constant 0 : i32
    %c0_i32_1 = arith.constant 0 : i32
    return %c0_i32, %c0_i32_0 : i32, i32
  }
  func.func @transform_5(%arg0: i32) -> (i32, i32) {
    %c0_i32 = arith.constant 0 : i32
    %c0_i32_0 = arith.constant 0 : i32
    %c0_i32_1 = arith.constant 0 : i32
    return %c0_i32, %c0_i32_0 : i32, i32
  }
  func.func @transform_6(%arg0: i32) -> (i32, i32) {
    %c0_i32 = arith.constant 0 : i32
    %c0_i32_0 = arith.constant 0 : i32
    %c0_i32_1 = arith.constant 0 : i32
    return %c0_i32, %c0_i32_0 : i32, i32
  }
  func.func @transform_7(%arg0: i32) -> (i32, i32) {
    %c0_i32 = arith.constant 0 : i32
    %c0_i32_0 = arith.constant 0 : i32
    %c0_i32_1 = arith.constant 0 : i32
    return %c0_i32, %c0_i32_0 : i32, i32
  }
  func.func @transform_8(%arg0: i32) -> (i32, i32) {
    %c0_i32 = arith.constant 0 : i32
    %c0_i32_0 = arith.constant 0 : i32
    return %arg0, %c0_i32 : i32, i32
  }
}

</mosaic_0001>

<llo_original>
// kernel: tpu_custom_call.1
$region0: #{tpu_custom_call.1}
  #allocation0 [shape = 'u32[]', space=smem, size = 0x4, offset = 0x4, fixed_abs, tag = 'smem constant byte address 0x4 - core index']
  #allocation1 [shape = 'u32[144,128]{1,0:T(1,128)}', space=vmem, size = 0x12000, scoped, tag = 'internal scratch']
  %s0 = inlined_call_operand.vmem [shape: f32[16,32], index: 0, kind: input, shape index: {}]
  %s1 = inlined_call_operand.vmem [shape: f32[2,1,8], index: 1, kind: input, shape index: {}]
  %s2 = inlined_call_operand.vmem [shape: f32[32,64], index: 2, kind: input, shape index: {}]
  %s3 = inlined_call_operand.vmem [shape: f32[32,32], index: 3, kind: input, shape index: {}]
  %s4 = inlined_call_operand.vmem [shape: f32[32,128], index: 4, kind: input, shape index: {}]
  %s5 = inlined_call_operand.vmem [shape: f32[128,32], index: 5, kind: input, shape index: {}]
  %s6 = inlined_call_operand.vmem [shape: f32[8,32], index: 6, kind: input, shape index: {}]
  %s7 = inlined_call_operand.vmem [shape: f32[1,128], index: 7, kind: input, shape index: {}]
  %s8 = inlined_call_operand.hbm [shape: f32[16,32], index: 8, kind: output, shape index: {}]
  %s9 = sld [smem:[#allocation0]]
  $region42: #{tpu_custom_call.1} parent=0
    _
  %s11 = ssub.s32 1, %s9
  %s12 = scalar_select 0, %s11, %s9
  $region1: #{tpu_custom_call.1} parent=0
    #allocation2 [shape = 'u8[8192]{0}', space=vmem, size = 0x2000, scoped, tag = 'output window, operand 0, single buffered']
    #allocation3 [shape = 's32[1]{0}', space=sflag, size = 0x4, scoped, tag = 'scoped memory for tpu_custom_call.1']
    %13 = vsyncpa [#allocation3], 0
    // Predicated region
    $region2: #{tpu_custom_call.1} parent=1 // pred_check
      _
    $region3: #{tpu_custom_call.1} parent=1 // pred_check_branch
      %15 = sbr.rel (0) target = $region5
    $region4: #{tpu_custom_call.1} parent=1 // pred_region
      _
    $region5: #{tpu_custom_call.1} parent=1 // pred_fallthru
      _
    // Predicated region
    $region6: #{tpu_custom_call.1} parent=1 // pred_check
      _
    $region7: #{tpu_custom_call.1} parent=1 // pred_check_branch
      %17 = sbr.rel (0) target = $region9
    $region8: #{tpu_custom_call.1} parent=1 // pred_region
      _
    $region9: #{tpu_custom_call.1} parent=1 // pred_fallthru
      _
    // Predicated region
    $region10: #{tpu_custom_call.1} parent=1 // pred_check
      _
    $region11: #{tpu_custom_call.1} parent=1 // pred_check_branch
      %19 = sbr.rel (0) target = $region13
    $region12: #{tpu_custom_call.1} parent=1 // pred_region
      _
    $region13: #{tpu_custom_call.1} parent=1 // pred_fallthru
      _
    // Predicated region
    $region14: #{tpu_custom_call.1} parent=1 // pred_check
      _
    $region15: #{tpu_custom_call.1} parent=1 // pred_check_branch
      %21 = sbr.rel (0) target = $region17
    $region16: #{tpu_custom_call.1} parent=1 // pred_region
      _
    $region17: #{tpu_custom_call.1} parent=1 // pred_fallthru
      _
    // Predicated region
    $region18: #{tpu_custom_call.1} parent=1 // pred_check
      _
    $region19: #{tpu_custom_call.1} parent=1 // pred_check_branch
      %23 = sbr.rel (0) target = $region21
    $region20: #{tpu_custom_call.1} parent=1 // pred_region
      _
    $region21: #{tpu_custom_call.1} parent=1 // pred_fallthru
      _
    // Predicated region
    $region22: #{tpu_custom_call.1} parent=1 // pred_check
      _
    $region23: #{tpu_custom_call.1} parent=1 // pred_check_branch
      %25 = sbr.rel (0) target = $region25
    $region24: #{tpu_custom_call.1} parent=1 // pred_region
      _
    $region25: #{tpu_custom_call.1} parent=1 // pred_fallthru
      _
    // Predicated region
    $region26: #{tpu_custom_call.1} parent=1 // pred_check
      _
    $region27: #{tpu_custom_call.1} parent=1 // pred_check_branch
      %27 = sbr.rel (0) target = $region29
    $region28: #{tpu_custom_call.1} parent=1 // pred_region
      _
    $region29: #{tpu_custom_call.1} parent=1 // pred_fallthru
      _
    // Predicated region
    $region30: #{tpu_custom_call.1} parent=1 // pred_check
      _
    $region31: #{tpu_custom_call.1} parent=1 // pred_check_branch
      %29 = sbr.rel (0) target = $region33
    $region32: #{tpu_custom_call.1} parent=1 // pred_region
      _
    $region33: #{tpu_custom_call.1} parent=1 // pred_fallthru
      _
    %v30 = vld [vmem:[%s0] sm:$0xff]
    %v31 = vld [vmem:[%s0 + $0x8] sm:$0xff]
    %v32 = vld [vmem:[%s1] sm:$0x1]
    %v33 = vld [vmem:[%s1 + $0x1] sm:$0x1]
    %v34 = vld [vmem:[%s6] sm:$0xff]
    %v35 = vld [vmem:[%s7] sm:$0x1]
    %v36 = vld [vmem:[%s3] sm:$0xff]
    %v37 = vld [vmem:[%s3 + $0x8] sm:$0xff]
    %v38 = vld [vmem:[%s3 + $0x10] sm:$0xff]
    %v39 = vld [vmem:[%s3 + $0x18] sm:$0xff]
    %v40 = vld [vmem:[%s2] sm:$0xff]
    %v41 = vld [vmem:[%s2 + $0x8] sm:$0xff]
    %v42 = vld [vmem:[%s2 + $0x10] sm:$0xff]
    %v43 = vld [vmem:[%s2 + $0x18] sm:$0xff]
    %vm44 = vcmask 261120
    %v46 = vsel %vm44, %v30, 0
    %v49 = vsel %vm44, %v31, 0
    %51 = vmatprep.subr.mxu0 0.0
    %52 = vmatpush1.msra.mxu0 0.0
    %53 = vmatprep.subr.mxu0 0.0
    %54 = vmatpush1.msra.mxu0 0.0
    %55 = vmatprep.subr.mxu0 0.0
    %56 = vmatpush1.msra.mxu0 0.0
    %57 = vmatprep.subr.mxu0 0.0
    %58 = vmatpush1.msra.mxu0 0.0
    %59 = vmatprep.subr.mxu0 0.0
    %60 = vmatpush1.msra.mxu0 0.0
    %61 = vmatprep.subr.mxu0 0.0
    %62 = vmatpush1.msra.mxu0 0.0
    %63 = vmatprep.subr.mxu0 0.0
    %64 = vmatpush1.msra.mxu0 0.0
    %65 = vmatprep.subr.mxu0 0.0
    %66 = vmatpush1.msra.mxu0 0.0
    %67 = vmatprep.subr.mxu0 0.0
    %68 = vmatpush1.msra.mxu0 0.0
    %69 = vmatprep.subr.mxu0 0.0
    %70 = vmatpush1.msra.mxu0 0.0
    %71 = vmatprep.subr.mxu0 0.0
    %72 = vmatpush1.msra.mxu0 0.0
    %73 = vmatprep.subr.mxu0 0.0
    %74 = vmatpush1.msra.mxu0 0.0
    %75 = vmatprep.subr.mxu0 0.0
    %76 = vmatpush1.msra.mxu0 %v43
    %77 = vmatprep.subr.mxu0 0.0
    %78 = vmatpush1.msra.mxu0 %v42
    %79 = vmatprep.subr.mxu0 0.0
    %80 = vmatpush1.msra.mxu0 %v41
    %81 = vmatprep.subr.mxu0 0.0
    %82 = vmatpush1.msra.mxu0 %v40
    %83 = vmatprep.subr.mxu0 0.0
    %84 = vmatpush2.msra.mxu0 0.0
    %85 = vmatprep.subr.mxu0 0.0
    %86 = vmatpush2.msra.mxu0 0.0
    %87 = vmatprep.subr.mxu0 0.0
    %88 = vmatpush2.msra.mxu0 0.0
    %89 = vmatprep.subr.mxu0 0.0
    %90 = vmatpush2.msra.mxu0 0.0
    %91 = vmatprep.subr.mxu0 0.0
    %92 = vmatpush2.msra.mxu0 0.0
    %93 = vmatprep.subr.mxu0 0.0
    %94 = vmatpush2.msra.mxu0 0.0
    %95 = vmatprep.subr.mxu0 0.0
    %96 = vmatpush2.msra.mxu0 0.0
    %97 = vmatprep.subr.mxu0 0.0
    %98 = vmatpush2.msra.mxu0 0.0
    %99 = vmatprep.subr.mxu0 0.0
    %100 = vmatpush2.msra.mxu0 0.0
    %101 = vmatprep.subr.mxu0 0.0
    %102 = vmatpush2.msra.mxu0 0.0
    %103 = vmatprep.subr.mxu0 0.0
    %104 = vmatpush2.msra.mxu0 0.0
    %105 = vmatprep.subr.mxu0 0.0
    %106 = vmatpush2.msra.mxu0 0.0
    %107 = vmatprep.subr.mxu0 0.0
    %108 = vmatpush2.msra.mxu0 0.0
    %109 = vmatprep.subr.mxu0 0.0
    %110 = vmatpush2.msra.mxu0 0.0
    %111 = vmatprep.subr.mxu0 0.0
    %112 = vmatpush2.msra.mxu0 0.0
    %113 = vmatprep.subr.mxu0 0.0
    %114 = vmatpush2.msra.mxu0 0.0
    %115 = vmatprep.mubr.f32.mxu0 0.0
    %116 = vmatmul.mubr.f32.gmra.mxu0 %v46
    %v117 = vpop.f32.mrf.mxu0
    %v118 = vadd.f32 0.0, %v117
    %v119 = vpop.f32.mrf.mxu0
    %120 = vmatprep.mubr.f32.mxu0 0.0
    %121 = vmatmul.mubr.f32.gmra.mxu0 %v49
    %v122 = vpop.f32.mrf.mxu0
    %v123 = vadd.f32 0.0, %v122
    %v124 = vpop.f32.mrf.mxu0
    %125 = vdwg.mxu0
    %v126 = vlaneseq
    %v127 = vshrl.u32 %v126, 7
    %v128 = vsub.s32 0, %v127
    %v129 = vrot.slane %v34, %v128
    %v130 = vadd.f32 %v118, %v129
    %v131 = vadd.f32 %v123, %v129
    %v132 = vmul.f32 %v130, 0.35355338
    %v133 = vmul.f32 %v131, 0.35355338
    %v134 = vlaneseq
    %v135 = vshrl.u32 %v134, 7
    %v136 = vsub.s32 1, %v135
    %v137 = vrot.slane %v34, %v136
    %139 = vrot.lane.b32.xlu0 %v137, 32
    %v140 = vpop.permute.xlu0 %139
    %v142 = vadd.f32 %v118, %v140
    %v143 = vadd.f32 %v123, %v140
    %vm144 = vcmp.eq.f32.partialorder %v32, 0.0
    %vm145 = vcmp.eq.f32.partialorder %v33, 0.0
    %v146 = vsel %vm144, -1e+20, 0.0
    %v147 = vsel %vm145, -1e+20, 0.0
    %v149 = vlaneseq
    %v150 = vshrl.u32 %v149, 7
    %v151 = vsub.s32 0, %v150
    %v152 = vrot.slane %v146, %v151
    %155 = vrot.lane.b32.xlu0 %v142, 96
    %v156 = vpop.permute.xlu0 %155
    %vm157 = vcmask 64512
    %v159 = vsel %vm157, %v132, 0
    %v161 = vsel %vm157, %v156, 0
    %163 = vmatprep.subr.mxu0 0.0
    %164 = vmatpush1.xpose.msra.mxu0 0.0
    %165 = vmatprep.subr.mxu0 0.0
    %166 = vmatpush1.xpose.msra.mxu0 0.0
    %167 = vmatprep.subr.mxu0 0.0
    %168 = vmatpush1.xpose.msra.mxu0 0.0
    %169 = vmatprep.subr.mxu0 0.0
    %170 = vmatpush1.xpose.msra.mxu0 0.0
    %171 = vmatprep.subr.mxu0 0.0
    %172 = vmatpush1.xpose.msra.mxu0 0.0
    %173 = vmatprep.subr.mxu0 0.0
    %174 = vmatpush1.xpose.msra.mxu0 0.0
    %175 = vmatprep.subr.mxu0 0.0
    %176 = vmatpush1.xpose.msra.mxu0 0.0
    %177 = vmatprep.subr.mxu0 0.0
    %178 = vmatpush1.xpose.msra.mxu0 0.0
    %179 = vmatprep.subr.mxu0 0.0
    %180 = vmatpush1.xpose.msra.mxu0 0.0
    %181 = vmatprep.subr.mxu0 0.0
    %182 = vmatpush1.xpose.msra.mxu0 0.0
    %183 = vmatprep.subr.mxu0 0.0
    %184 = vmatpush1.xpose.msra.mxu0 0.0
    %185 = vmatprep.subr.mxu0 0.0
    %186 = vmatpush1.xpose.msra.mxu0 0.0
    %187 = vmatprep.subr.mxu0 0.0
    %188 = vmatpush1.xpose.msra.mxu0 0.0
    %189 = vmatprep.subr.mxu0 0.0
    %190 = vmatpush1.xpose.msra.mxu0 0.0
    %191 = vmatprep.subr.mxu0 0.0
    %192 = vmatpush1.xpose.msra.mxu0 0.0
    %193 = vmatprep.subr.mxu0 0.0
    %194 = vmatpush1.xpose.msra.mxu0 %v161
    %195 = vmatprep.subr.mxu0 0.0
    %196 = vmatpush2.xpose.msra.mxu0 0.0
    %197 = vmatprep.subr.mxu0 0.0
    %198 = vmatpush2.xpose.msra.mxu0 0.0
    %199 = vmatprep.subr.mxu0 0.0
    %200 = vmatpush2.xpose.msra.mxu0 0.0
    %201 = vmatprep.subr.mxu0 0.0
    %202 = vmatpush2.xpose.msra.mxu0 0.0
    %203 = vmatprep.subr.mxu0 0.0
    %204 = vmatpush2.xpose.msra.mxu0 0.0
    %205 = vmatprep.subr.mxu0 0.0
    %206 = vmatpush2.xpose.msra.mxu0 0.0
    %207 = vmatprep.subr.mxu0 0.0
    %208 = vmatpush2.xpose.msra.mxu0 0.0
    %209 = vmatprep.subr.mxu0 0.0
    %210 = vmatpush2.xpose.msra.mxu0 0.0
    %211 = vmatprep.subr.mxu0 0.0
    %212 = vmatpush2.xpose.msra.mxu0 0.0
    %213 = vmatprep.subr.mxu0 0.0
    %214 = vmatpush2.xpose.msra.mxu0 0.0
    %215 = vmatprep.subr.mxu0 0.0
    %216 = vmatpush2.xpose.msra.mxu0 0.0
    %217 = vmatprep.subr.mxu0 0.0
    %218 = vmatpush2.xpose.msra.mxu0 0.0
    %219 = vmatprep.subr.mxu0 0.0
    %220 = vmatpush2.xpose.msra.mxu0 0.0
    %221 = vmatprep.subr.mxu0 0.0
    %222 = vmatpush2.xpose.msra.mxu0 0.0
    %223 = vmatprep.subr.mxu0 0.0
    %224 = vmatpush2.xpose.msra.mxu0 0.0
    %225 = vmatprep.subr.mxu0 0.0
    %226 = vmatpush2.xpose.msra.mxu0 0.0
    %227 = vmatprep.mubr.f32.mxu0 0.0
    %228 = vmatmul.mubr.f32.gmra.mxu0 %v159
    %v229 = vpop.f32.mrf.mxu0
    %v230 = vadd.f32 %v152, %v229
    %v231 = vpop.f32.mrf.mxu0
    %232 = vdwg.mxu0
    %v233 = vsel %vm157, %v230, -inf
    %234 = vmax.xlane.f32.xlu0 %v233
    %v235 = vpop.xlane.xlu0 %234
    %v236 = vsub.f32 %v230, %v235
    %v237 = vmul.f32 %v236, 1.442695
    %v238 = vpow.pop %v237
    %v239 = vsel %vm157, %v238, 0.0
    %240 = vadd.xlane.f32.xlu0 %v239
    %v241 = vpop.xlane.xlu0 %240
    %v242 = vrcp.pop %v241
    %v243 = vmul.f32 %v238, %v242
    %v246 = vsel %vm157, %v243, 0
    %248 = vmatprep.subr.mxu0 0.0
    %249 = vmatpush1.msra.mxu0 0.0
    %250 = vmatprep.subr.mxu0 0.0
    %251 = vmatpush1.msra.mxu0 0.0
    %252 = vmatprep.subr.mxu0 0.0
    %253 = vmatpush1.msra.mxu0 0.0
    %254 = vmatprep.subr.mxu0 0.0
    %255 = vmatpush1.msra.mxu0 0.0
    %256 = vmatprep.subr.mxu0 0.0
    %257 = vmatpush1.msra.mxu0 0.0
    %258 = vmatprep.subr.mxu0 0.0
    %259 = vmatpush1.msra.mxu0 0.0
    %260 = vmatprep.subr.mxu0 0.0
    %261 = vmatpush1.msra.mxu0 0.0
    %262 = vmatprep.subr.mxu0 0.0
    %263 = vmatpush1.msra.mxu0 0.0
    %264 = vmatprep.subr.mxu0 0.0
    %265 = vmatpush1.msra.mxu0 0.0
    %266 = vmatprep.subr.mxu0 0.0
    %267 = vmatpush1.msra.mxu0 0.0
    %268 = vmatprep.subr.mxu0 0.0
    %269 = vmatpush1.msra.mxu0 0.0
    %270 = vmatprep.subr.mxu0 0.0
    %271 = vmatpush1.msra.mxu0 0.0
    %272 = vmatprep.subr.mxu0 0.0
    %273 = vmatpush1.msra.mxu0 0.0
    %274 = vmatprep.subr.mxu0 0.0
    %275 = vmatpush1.msra.mxu0 0.0
    %276 = vmatprep.subr.mxu0 0.0
    %277 = vmatpush1.msra.mxu0 0.0
    %278 = vmatprep.subr.mxu0 0.0
    %279 = vmatpush1.msra.mxu0 %v156
    %280 = vmatprep.subr.mxu0 0.0
    %281 = vmatpush2.msra.mxu0 0.0
    %282 = vmatprep.subr.mxu0 0.0
    %283 = vmatpush2.msra.mxu0 0.0
    %284 = vmatprep.subr.mxu0 0.0
    %285 = vmatpush2.msra.mxu0 0.0
    %286 = vmatprep.subr.mxu0 0.0
    %287 = vmatpush2.msra.mxu0 0.0
    %288 = vmatprep.subr.mxu0 0.0
    %289 = vmatpush2.msra.mxu0 0.0
    %290 = vmatprep.subr.mxu0 0.0
    %291 = vmatpush2.msra.mxu0 0.0
    %292 = vmatprep.subr.mxu0 0.0
    %293 = vmatpush2.msra.mxu0 0.0
    %294 = vmatprep.subr.mxu0 0.0
    %295 = vmatpush2.msra.mxu0 0.0
    %296 = vmatprep.subr.mxu0 0.0
    %297 = vmatpush2.msra.mxu0 0.0
    %298 = vmatprep.subr.mxu0 0.0
    %299 = vmatpush2.msra.mxu0 0.0
    %300 = vmatprep.subr.mxu0 0.0
    %301 = vmatpush2.msra.mxu0 0.0
    %302 = vmatprep.subr.mxu0 0.0
    %303 = vmatpush2.msra.mxu0 0.0
    %304 = vmatprep.subr.mxu0 0.0
    %305 = vmatpush2.msra.mxu0 0.0
    %306 = vmatprep.subr.mxu0 0.0
    %307 = vmatpush2.msra.mxu0 0.0
    %308 = vmatprep.subr.mxu0 0.0
    %309 = vmatpush2.msra.mxu0 0.0
    %310 = vmatprep.subr.mxu0 0.0
    %311 = vmatpush2.msra.mxu0 0.0
    %312 = vmatprep.mubr.f32.mxu0 0.0
    %313 = vmatmul.mubr.f32.gmra.mxu0 %v246
    %v314 = vpop.f32.mrf.mxu0
    %v315 = vadd.f32 0.0, %v314
    %v316 = vpop.f32.mrf.mxu0
    %317 = vdwg.mxu0
    %318 = vrot.lane.b32.xlu0 %v132, 120
    %v319 = vpop.permute.xlu0 %318
    %320 = vrot.lane.b32.xlu0 %v142, 88
    %v321 = vpop.permute.xlu0 %320
    %v322 = vsel %vm157, %v319, 0
    %v324 = vsel %vm157, %v321, 0
    %326 = vmatprep.subr.mxu0 0.0
    %327 = vmatpush1.xpose.msra.mxu0 0.0
    %328 = vmatprep.subr.mxu0 0.0
    %329 = vmatpush1.xpose.msra.mxu0 0.0
    %330 = vmatprep.subr.mxu0 0.0
    %331 = vmatpush1.xpose.msra.mxu0 0.0
    %332 = vmatprep.subr.mxu0 0.0
    %333 = vmatpush1.xpose.msra.mxu0 0.0
    %334 = vmatprep.subr.mxu0 0.0
    %335 = vmatpush1.xpose.msra.mxu0 0.0
    %336 = vmatprep.subr.mxu0 0.0
    %337 = vmatpush1.xpose.msra.mxu0 0.0
    %338 = vmatprep.subr.mxu0 0.0
    %339 = vmatpush1.xpose.msra.mxu0 0.0
    %340 = vmatprep.subr.mxu0 0.0
    %341 = vmatpush1.xpose.msra.mxu0 0.0
    %342 = vmatprep.subr.mxu0 0.0
    %343 = vmatpush1.xpose.msra.mxu0 0.0
    %344 = vmatprep.subr.mxu0 0.0
    %345 = vmatpush1.xpose.msra.mxu0 0.0
    %346 = vmatprep.subr.mxu0 0.0
    %347 = vmatpush1.xpose.msra.mxu0 0.0
    %348 = vmatprep.subr.mxu0 0.0
    %349 = vmatpush1.xpose.msra.mxu0 0.0
    %350 = vmatprep.subr.mxu0 0.0
    %351 = vmatpush1.xpose.msra.mxu0 0.0
    %352 = vmatprep.subr.mxu0 0.0
    %353 = vmatpush1.xpose.msra.mxu0 0.0
    %354 = vmatprep.subr.mxu0 0.0
    %355 = vmatpush1.xpose.msra.mxu0 0.0
    %356 = vmatprep.subr.mxu0 0.0
    %357 = vmatpush1.xpose.msra.mxu0 %v324
    %358 = vmatprep.subr.mxu0 0.0
    %359 = vmatpush2.xpose.msra.mxu0 0.0
    %360 = vmatprep.subr.mxu0 0.0
    %361 = vmatpush2.xpose.msra.mxu0 0.0
    %362 = vmatprep.subr.mxu0 0.0
    %363 = vmatpush2.xpose.msra.mxu0 0.0
    %364 = vmatprep.subr.mxu0 0.0
    %365 = vmatpush2.xpose.msra.mxu0 0.0
    %366 = vmatprep.subr.mxu0 0.0
    %367 = vmatpush2.xpose.msra.mxu0 0.0
    %368 = vmatprep.subr.mxu0 0.0
    %369 = vmatpush2.xpose.msra.mxu0 0.0
    %370 = vmatprep.subr.mxu0 0.0
    %371 = vmatpush2.xpose.msra.mxu0 0.0
    %372 = vmatprep.subr.mxu0 0.0
    %373 = vmatpush2.xpose.msra.mxu0 0.0
    %374 = vmatprep.subr.mxu0 0.0
    %375 = vmatpush2.xpose.msra.mxu0 0.0
    %376 = vmatprep.subr.mxu0 0.0
    %377 = vmatpush2.xpose.msra.mxu0 0.0
    %378 = vmatprep.subr.mxu0 0.0
    %379 = vmatpush2.xpose.msra.mxu0 0.0
    %380 = vmatprep.subr.mxu0 0.0
    %381 = vmatpush2.xpose.msra.mxu0 0.0
    %382 = vmatprep.subr.mxu0 0.0
    %383 = vmatpush2.xpose.msra.mxu0 0.0
    %384 = vmatprep.subr.mxu0 0.0
    %385 = vmatpush2.xpose.msra.mxu0 0.0
    %386 = vmatprep.subr.mxu0 0.0
    %387 = vmatpush2.xpose.msra.mxu0 0.0
    %388 = vmatprep.subr.mxu0 0.0
    %389 = vmatpush2.xpose.msra.mxu0 0.0
    %390 = vmatprep.mubr.f32.mxu0 0.0
    %391 = vmatmul.mubr.f32.gmra.mxu0 %v322
    %v392 = vpop.f32.mrf.mxu0
    %v393 = vadd.f32 %v152, %v392
    %v394 = vpop.f32.mrf.mxu0
    %395 = vdwg.mxu0
    %v396 = vsel %vm157, %v393, -inf
    %397 = vmax.xlane.f32.xlu0 %v396
    %v398 = vpop.xlane.xlu0 %397
    %v399 = vsub.f32 %v393, %v398
    %v400 = vmul.f32 %v399, 1.442695
    %v401 = vpow.pop %v400
    %v402 = vsel %vm157, %v401, 0.0
    %403 = vadd.xlane.f32.xlu0 %v402
    %v404 = vpop.xlane.xlu0 %403
    %v405 = vrcp.pop %v404
    %v406 = vmul.f32 %v401, %v405
    %v409 = vsel %vm157, %v406, 0
    %411 = vmatprep.subr.mxu0 0.0
    %412 = vmatpush1.msra.mxu0 0.0
    %413 = vmatprep.subr.mxu0 0.0
    %414 = vmatpush1.msra.mxu0 0.0
    %415 = vmatprep.subr.mxu0 0.0
    %416 = vmatpush1.msra.mxu0 0.0
    %417 = vmatprep.subr.mxu0 0.0
    %418 = vmatpush1.msra.mxu0 0.0
    %419 = vmatprep.subr.mxu0 0.0
    %420 = vmatpush1.msra.mxu0 0.0
    %421 = vmatprep.subr.mxu0 0.0
    %422 = vmatpush1.msra.mxu0 0.0
    %423 = vmatprep.subr.mxu0 0.0
    %424 = vmatpush1.msra.mxu0 0.0
    %425 = vmatprep.subr.mxu0 0.0
    %426 = vmatpush1.msra.mxu0 0.0
    %427 = vmatprep.subr.mxu0 0.0
    %428 = vmatpush1.msra.mxu0 0.0
    %429 = vmatprep.subr.mxu0 0.0
    %430 = vmatpush1.msra.mxu0 0.0
    %431 = vmatprep.subr.mxu0 0.0
    %432 = vmatpush1.msra.mxu0 0.0
    %433 = vmatprep.subr.mxu0 0.0
    %434 = vmatpush1.msra.mxu0 0.0
    %435 = vmatprep.subr.mxu0 0.0
    %436 = vmatpush1.msra.mxu0 0.0
    %437 = vmatprep.subr.mxu0 0.0
    %438 = vmatpush1.msra.mxu0 0.0
    %439 = vmatprep.subr.mxu0 0.0
    %440 = vmatpush1.msra.mxu0 0.0
    %441 = vmatprep.subr.mxu0 0.0
    %442 = vmatpush1.msra.mxu0 %v321
    %443 = vmatprep.subr.mxu0 0.0
    %444 = vmatpush2.msra.mxu0 0.0
    %445 = vmatprep.subr.mxu0 0.0
    %446 = vmatpush2.msra.mxu0 0.0
    %447 = vmatprep.subr.mxu0 0.0
    %448 = vmatpush2.msra.mxu0 0.0
    %449 = vmatprep.subr.mxu0 0.0
    %450 = vmatpush2.msra.mxu0 0.0
    %451 = vmatprep.subr.mxu0 0.0
    %452 = vmatpush2.msra.mxu0 0.0
    %453 = vmatprep.subr.mxu0 0.0
    %454 = vmatpush2.msra.mxu0 0.0
    %455 = vmatprep.subr.mxu0 0.0
    %456 = vmatpush2.msra.mxu0 0.0
    %457 = vmatprep.subr.mxu0 0.0
    %458 = vmatpush2.msra.mxu0 0.0
    %459 = vmatprep.subr.mxu0 0.0
    %460 = vmatpush2.msra.mxu0 0.0
    %461 = vmatprep.subr.mxu0 0.0
    %462 = vmatpush2.msra.mxu0 0.0
    %463 = vmatprep.subr.mxu0 0.0
    %464 = vmatpush2.msra.mxu0 0.0
    %465 = vmatprep.subr.mxu0 0.0
    %466 = vmatpush2.msra.mxu0 0.0
    %467 = vmatprep.subr.mxu0 0.0
    %468 = vmatpush2.msra.mxu0 0.0
    %469 = vmatprep.subr.mxu0 0.0
    %470 = vmatpush2.msra.mxu0 0.0
    %471 = vmatprep.subr.mxu0 0.0
    %472 = vmatpush2.msra.mxu0 0.0
    %473 = vmatprep.subr.mxu0 0.0
    %474 = vmatpush2.msra.mxu0 0.0
    %475 = vmatprep.mubr.f32.mxu0 0.0
    %476 = vmatmul.mubr.f32.gmra.mxu0 %v409
    %v477 = vpop.f32.mrf.mxu0
    %v478 = vadd.f32 0.0, %v477
    %v479 = vpop.f32.mrf.mxu0
    %480 = vdwg.mxu0
    %v482 = vsel %vm157, %v478, 0
    %484 = vmatprep.subr.mxu0 0.0
    %485 = vmatpush1.msra.mxu0 0.0
    %486 = vmatprep.subr.mxu0 0.0
    %487 = vmatpush1.msra.mxu0 0.0
    %488 = vmatprep.subr.mxu0 0.0
    %489 = vmatpush1.msra.mxu0 0.0
    %490 = vmatprep.subr.mxu0 0.0
    %491 = vmatpush1.msra.mxu0 0.0
    %492 = vmatprep.subr.mxu0 0.0
    %493 = vmatpush1.msra.mxu0 0.0
    %494 = vmatprep.subr.mxu0 0.0
    %495 = vmatpush1.msra.mxu0 0.0
    %496 = vmatprep.subr.mxu0 0.0
    %497 = vmatpush1.msra.mxu0 0.0
    %498 = vmatprep.subr.mxu0 0.0
    %499 = vmatpush1.msra.mxu0 0.0
    %500 = vmatprep.subr.mxu0 0.0
    %501 = vmatpush1.msra.mxu0 0.0
    %502 = vmatprep.subr.mxu0 0.0
    %503 = vmatpush1.msra.mxu0 0.0
    %504 = vmatprep.subr.mxu0 0.0
    %505 = vmatpush1.msra.mxu0 0.0
    %506 = vmatprep.subr.mxu0 0.0
    %507 = vmatpush1.msra.mxu0 0.0
    %508 = vmatprep.subr.mxu0 0.0
    %509 = vmatpush1.msra.mxu0 0.0
    %510 = vmatprep.subr.mxu0 0.0
    %511 = vmatpush1.msra.mxu0 0.0
    %512 = vmatprep.subr.mxu0 0.0
    %513 = vmatpush1.msra.mxu0 0.0
    %514 = vmatprep.subr.mxu0 0.0
    %515 = vmatpush1.msra.mxu0 %v37
    %516 = vmatprep.subr.mxu0 0.0
    %517 = vmatpush2.msra.mxu0 0.0
    %518 = vmatprep.subr.mxu0 0.0
    %519 = vmatpush2.msra.mxu0 0.0
    %520 = vmatprep.subr.mxu0 0.0
    %521 = vmatpush2.msra.mxu0 0.0
    %522 = vmatprep.subr.mxu0 0.0
    %523 = vmatpush2.msra.mxu0 0.0
    %524 = vmatprep.subr.mxu0 0.0
    %525 = vmatpush2.msra.mxu0 0.0
    %526 = vmatprep.subr.mxu0 0.0
    %527 = vmatpush2.msra.mxu0 0.0
    %528 = vmatprep.subr.mxu0 0.0
    %529 = vmatpush2.msra.mxu0 0.0
    %530 = vmatprep.subr.mxu0 0.0
    %531 = vmatpush2.msra.mxu0 0.0
    %532 = vmatprep.subr.mxu0 0.0
    %533 = vmatpush2.msra.mxu0 0.0
    %534 = vmatprep.subr.mxu0 0.0
    %535 = vmatpush2.msra.mxu0 0.0
    %536 = vmatprep.subr.mxu0 0.0
    %537 = vmatpush2.msra.mxu0 0.0
    %538 = vmatprep.subr.mxu0 0.0
    %539 = vmatpush2.msra.mxu0 0.0
    %540 = vmatprep.subr.mxu0 0.0
    %541 = vmatpush2.msra.mxu0 0.0
    %542 = vmatprep.subr.mxu0 0.0
    %543 = vmatpush2.msra.mxu0 0.0
    %544 = vmatprep.subr.mxu0 0.0
    %545 = vmatpush2.msra.mxu0 0.0
    %546 = vmatprep.subr.mxu0 0.0
    %547 = vmatpush2.msra.mxu0 0.0
    %548 = vmatprep.mubr.f32.mxu0 0.0
    %549 = vmatmul.mubr.f32.gmra.mxu0 %v482
    %v550 = vpop.f32.mrf.mxu0
    %v551 = vadd.f32 0.0, %v550
    %v552 = vpop.f32.mrf.mxu0
    %553 = vdwg.mxu0
    %v555 = vsel %vm157, %v315, 0
    %557 = vmatprep.subr.mxu0 0.0
    %558 = vmatpush1.msra.mxu0 0.0
    %559 = vmatprep.subr.mxu0 0.0
    %560 = vmatpush1.msra.mxu0 0.0
    %561 = vmatprep.subr.mxu0 0.0
    %562 = vmatpush1.msra.mxu0 0.0
    %563 = vmatprep.subr.mxu0 0.0
    %564 = vmatpush1.msra.mxu0 0.0
    %565 = vmatprep.subr.mxu0 0.0
    %566 = vmatpush1.msra.mxu0 0.0
    %567 = vmatprep.subr.mxu0 0.0
    %568 = vmatpush1.msra.mxu0 0.0
    %569 = vmatprep.subr.mxu0 0.0
    %570 = vmatpush1.msra.mxu0 0.0
    %571 = vmatprep.subr.mxu0 0.0
    %572 = vmatpush1.msra.mxu0 0.0
    %573 = vmatprep.subr.mxu0 0.0
    %574 = vmatpush1.msra.mxu0 0.0
    %575 = vmatprep.subr.mxu0 0.0
    %576 = vmatpush1.msra.mxu0 0.0
    %577 = vmatprep.subr.mxu0 0.0
    %578 = vmatpush1.msra.mxu0 0.0
    %579 = vmatprep.subr.mxu0 0.0
    %580 = vmatpush1.msra.mxu0 0.0
    %581 = vmatprep.subr.mxu0 0.0
    %582 = vmatpush1.msra.mxu0 0.0
    %583 = vmatprep.subr.mxu0 0.0
    %584 = vmatpush1.msra.mxu0 0.0
    %585 = vmatprep.subr.mxu0 0.0
    %586 = vmatpush1.msra.mxu0 0.0
    %587 = vmatprep.subr.mxu0 0.0
    %588 = vmatpush1.msra.mxu0 %v36
    %589 = vmatprep.subr.mxu0 0.0
    %590 = vmatpush2.msra.mxu0 0.0
    %591 = vmatprep.subr.mxu0 0.0
    %592 = vmatpush2.msra.mxu0 0.0
    %593 = vmatprep.subr.mxu0 0.0
    %594 = vmatpush2.msra.mxu0 0.0
    %595 = vmatprep.subr.mxu0 0.0
    %596 = vmatpush2.msra.mxu0 0.0
    %597 = vmatprep.subr.mxu0 0.0
    %598 = vmatpush2.msra.mxu0 0.0
    %599 = vmatprep.subr.mxu0 0.0
    %600 = vmatpush2.msra.mxu0 0.0
    %601 = vmatprep.subr.mxu0 0.0
    %602 = vmatpush2.msra.mxu0 0.0
    %603 = vmatprep.subr.mxu0 0.0
    %604 = vmatpush2.msra.mxu0 0.0
    %605 = vmatprep.subr.mxu0 0.0
    %606 = vmatpush2.msra.mxu0 0.0
    %607 = vmatprep.subr.mxu0 0.0
    %608 = vmatpush2.msra.mxu0 0.0
    %609 = vmatprep.subr.mxu0 0.0
    %610 = vmatpush2.msra.mxu0 0.0
    %611 = vmatprep.subr.mxu0 0.0
    %612 = vmatpush2.msra.mxu0 0.0
    %613 = vmatprep.subr.mxu0 0.0
    %614 = vmatpush2.msra.mxu0 0.0
    %615 = vmatprep.subr.mxu0 0.0
    %616 = vmatpush2.msra.mxu0 0.0
    %617 = vmatprep.subr.mxu0 0.0
    %618 = vmatpush2.msra.mxu0 0.0
    %619 = vmatprep.subr.mxu0 0.0
    %620 = vmatpush2.msra.mxu0 0.0
    %621 = vmatprep.mubr.f32.mxu0 0.0
    %622 = vmatmul.mubr.f32.gmra.mxu0 %v555
    %v623 = vpop.f32.mrf.mxu0
    %v624 = vadd.f32 %v551, %v623
    %v625 = vpop.f32.mrf.mxu0
    %626 = vdwg.mxu0
    %627 = vrot.lane.b32.xlu0 %v132, 112
    %v628 = vpop.permute.xlu0 %627
    %629 = vrot.lane.b32.xlu0 %v142, 80
    %v630 = vpop.permute.xlu0 %629
    %v631 = vsel %vm157, %v628, 0
    %v633 = vsel %vm157, %v630, 0
    %635 = vmatprep.subr.mxu0 0.0
    %636 = vmatpush1.xpose.msra.mxu0 0.0
    %637 = vmatprep.subr.mxu0 0.0
    %638 = vmatpush1.xpose.msra.mxu0 0.0
    %639 = vmatprep.subr.mxu0 0.0
    %640 = vmatpush1.xpose.msra.mxu0 0.0
    %641 = vmatprep.subr.mxu0 0.0
    %642 = vmatpush1.xpose.msra.mxu0 0.0
    %643 = vmatprep.subr.mxu0 0.0
    %644 = vmatpush1.xpose.msra.mxu0 0.0
    %645 = vmatprep.subr.mxu0 0.0
    %646 = vmatpush1.xpose.msra.mxu0 0.0
    %647 = vmatprep.subr.mxu0 0.0
    %648 = vmatpush1.xpose.msra.mxu0 0.0
    %649 = vmatprep.subr.mxu0 0.0
    %650 = vmatpush1.xpose.msra.mxu0 0.0
    %651 = vmatprep.subr.mxu0 0.0
    %652 = vmatpush1.xpose.msra.mxu0 0.0
    %653 = vmatprep.subr.mxu0 0.0
    %654 = vmatpush1.xpose.msra.mxu0 0.0
    %655 = vmatprep.subr.mxu0 0.0
    %656 = vmatpush1.xpose.msra.mxu0 0.0
    %657 = vmatprep.subr.mxu0 0.0
    %658 = vmatpush1.xpose.msra.mxu0 0.0
    %659 = vmatprep.subr.mxu0 0.0
    %660 = vmatpush1.xpose.msra.mxu0 0.0
    %661 = vmatprep.subr.mxu0 0.0
    %662 = vmatpush1.xpose.msra.mxu0 0.0
    %663 = vmatprep.subr.mxu0 0.0
    %664 = vmatpush1.xpose.msra.mxu0 0.0
    %665 = vmatprep.subr.mxu0 0.0
    %666 = vmatpush1.xpose.msra.mxu0 %v633
    %667 = vmatprep.subr.mxu0 0.0
    %668 = vmatpush2.xpose.msra.mxu0 0.0
    %669 = vmatprep.subr.mxu0 0.0
    %670 = vmatpush2.xpose.msra.mxu0 0.0
    %671 = vmatprep.subr.mxu0 0.0
    %672 = vmatpush2.xpose.msra.mxu0 0.0
    %673 = vmatprep.subr.mxu0 0.0
    %674 = vmatpush2.xpose.msra.mxu0 0.0
    %675 = vmatprep.subr.mxu0 0.0
    %676 = vmatpush2.xpose.msra.mxu0 0.0
    %677 = vmatprep.subr.mxu0 0.0
    %678 = vmatpush2.xpose.msra.mxu0 0.0
    %679 = vmatprep.subr.mxu0 0.0
    %680 = vmatpush2.xpose.msra.mxu0 0.0
    %681 = vmatprep.subr.mxu0 0.0
    %682 = vmatpush2.xpose.msra.mxu0 0.0
    %683 = vmatprep.subr.mxu0 0.0
    %684 = vmatpush2.xpose.msra.mxu0 0.0
    %685 = vmatprep.subr.mxu0 0.0
    %686 = vmatpush2.xpose.msra.mxu0 0.0
    %687 = vmatprep.subr.mxu0 0.0
    %688 = vmatpush2.xpose.msra.mxu0 0.0
    %689 = vmatprep.subr.mxu0 0.0
    %690 = vmatpush2.xpose.msra.mxu0 0.0
    %691 = vmatprep.subr.mxu0 0.0
    %692 = vmatpush2.xpose.msra.mxu0 0.0
    %693 = vmatprep.subr.mxu0 0.0
    %694 = vmatpush2.xpose.msra.mxu0 0.0
    %695 = vmatprep.subr.mxu0 0.0
    %696 = vmatpush2.xpose.msra.mxu0 0.0
    %697 = vmatprep.subr.mxu0 0.0
    %698 = vmatpush2.xpose.msra.mxu0 0.0
    %699 = vmatprep.mubr.f32.mxu0 0.0
    %700 = vmatmul.mubr.f32.gmra.mxu0 %v631
    %v701 = vpop.f32.mrf.mxu0
    %v702 = vadd.f32 %v152, %v701
    %v703 = vpop.f32.mrf.mxu0
    %704 = vdwg.mxu0
    %v705 = vsel %vm157, %v702, -inf
    %706 = vmax.xlane.f32.xlu0 %v705
    %v707 = vpop.xlane.xlu0 %706
    %v708 = vsub.f32 %v702, %v707
    %v709 = vmul.f32 %v708, 1.442695
    %v710 = vpow.pop %v709
    %v711 = vsel %vm157, %v710, 0.0
    %712 = vadd.xlane.f32.xlu0 %v711
    %v713 = vpop.xlane.xlu0 %712
    %v714 = vrcp.pop %v713
    %v715 = vmul.f32 %v710, %v714
    %v718 = vsel %vm157, %v715, 0
    %720 = vmatprep.subr.mxu0 0.0
    %721 = vmatpush1.msra.mxu0 0.0
    %722 = vmatprep.subr.mxu0 0.0
    %723 = vmatpush1.msra.mxu0 0.0
    %724 = vmatprep.subr.mxu0 0.0
    %725 = vmatpush1.msra.mxu0 0.0
    %726 = vmatprep.subr.mxu0 0.0
    %727 = vmatpush1.msra.mxu0 0.0
    %728 = vmatprep.subr.mxu0 0.0
    %729 = vmatpush1.msra.mxu0 0.0
    %730 = vmatprep.subr.mxu0 0.0
    %731 = vmatpush1.msra.mxu0 0.0
    %732 = vmatprep.subr.mxu0 0.0
    %733 = vmatpush1.msra.mxu0 0.0
    %734 = vmatprep.subr.mxu0 0.0
    %735 = vmatpush1.msra.mxu0 0.0
    %736 = vmatprep.subr.mxu0 0.0
    %737 = vmatpush1.msra.mxu0 0.0
    %738 = vmatprep.subr.mxu0 0.0
    %739 = vmatpush1.msra.mxu0 0.0
    %740 = vmatprep.subr.mxu0 0.0
    %741 = vmatpush1.msra.mxu0 0.0
    %742 = vmatprep.subr.mxu0 0.0
    %743 = vmatpush1.msra.mxu0 0.0
    %744 = vmatprep.subr.mxu0 0.0
    %745 = vmatpush1.msra.mxu0 0.0
    %746 = vmatprep.subr.mxu0 0.0
    %747 = vmatpush1.msra.mxu0 0.0
    %748 = vmatprep.subr.mxu0 0.0
    %749 = vmatpush1.msra.mxu0 0.0
    %750 = vmatprep.subr.mxu0 0.0
    %751 = vmatpush1.msra.mxu0 %v630
    %752 = vmatprep.subr.mxu0 0.0
    %753 = vmatpush2.msra.mxu0 0.0
    %754 = vmatprep.subr.mxu0 0.0
    %755 = vmatpush2.msra.mxu0 0.0
    %756 = vmatprep.subr.mxu0 0.0
    %757 = vmatpush2.msra.mxu0 0.0
    %758 = vmatprep.subr.mxu0 0.0
    %759 = vmatpush2.msra.mxu0 0.0
    %760 = vmatprep.subr.mxu0 0.0
    %761 = vmatpush2.msra.mxu0 0.0
    %762 = vmatprep.subr.mxu0 0.0
    %763 = vmatpush2.msra.mxu0 0.0
    %764 = vmatprep.subr.mxu0 0.0
    %765 = vmatpush2.msra.mxu0 0.0
    %766 = vmatprep.subr.mxu0 0.0
    %767 = vmatpush2.msra.mxu0 0.0
    %768 = vmatprep.subr.mxu0 0.0
    %769 = vmatpush2.msra.mxu0 0.0
    %770 = vmatprep.subr.mxu0 0.0
    %771 = vmatpush2.msra.mxu0 0.0
    %772 = vmatprep.subr.mxu0 0.0
    %773 = vmatpush2.msra.mxu0 0.0
    %774 = vmatprep.subr.mxu0 0.0
    %775 = vmatpush2.msra.mxu0 0.0
    %776 = vmatprep.subr.mxu0 0.0
    %777 = vmatpush2.msra.mxu0 0.0
    %778 = vmatprep.subr.mxu0 0.0
    %779 = vmatpush2.msra.mxu0 0.0
    %780 = vmatprep.subr.mxu0 0.0
    %781 = vmatpush2.msra.mxu0 0.0
    %782 = vmatprep.subr.mxu0 0.0
    %783 = vmatpush2.msra.mxu0 0.0
    %784 = vmatprep.mubr.f32.mxu0 0.0
    %785 = vmatmul.mubr.f32.gmra.mxu0 %v718
    %v786 = vpop.f32.mrf.mxu0
    %v787 = vadd.f32 0.0, %v786
    %v788 = vpop.f32.mrf.mxu0
    %789 = vdwg.mxu0
    %v791 = vsel %vm157, %v787, 0
    %793 = vmatprep.subr.mxu0 0.0
    %794 = vmatpush1.msra.mxu0 0.0
    %795 = vmatprep.subr.mxu0 0.0
    %796 = vmatpush1.msra.mxu0 0.0
    %797 = vmatprep.subr.mxu0 0.0
    %798 = vmatpush1.msra.mxu0 0.0
    %799 = vmatprep.subr.mxu0 0.0
    %800 = vmatpush1.msra.mxu0 0.0
    %801 = vmatprep.subr.mxu0 0.0
    %802 = vmatpush1.msra.mxu0 0.0
    %803 = vmatprep.subr.mxu0 0.0
    %804 = vmatpush1.msra.mxu0 0.0
    %805 = vmatprep.subr.mxu0 0.0
    %806 = vmatpush1.msra.mxu0 0.0
    %807 = vmatprep.subr.mxu0 0.0
    %808 = vmatpush1.msra.mxu0 0.0
    %809 = vmatprep.subr.mxu0 0.0
    %810 = vmatpush1.msra.mxu0 0.0
    %811 = vmatprep.subr.mxu0 0.0
    %812 = vmatpush1.msra.mxu0 0.0
    %813 = vmatprep.subr.mxu0 0.0
    %814 = vmatpush1.msra.mxu0 0.0
    %815 = vmatprep.subr.mxu0 0.0
    %816 = vmatpush1.msra.mxu0 0.0
    %817 = vmatprep.subr.mxu0 0.0
    %818 = vmatpush1.msra.mxu0 0.0
    %819 = vmatprep.subr.mxu0 0.0
    %820 = vmatpush1.msra.mxu0 0.0
    %821 = vmatprep.subr.mxu0 0.0
    %822 = vmatpush1.msra.mxu0 0.0
    %823 = vmatprep.subr.mxu0 0.0
    %824 = vmatpush1.msra.mxu0 %v38
    %825 = vmatprep.subr.mxu0 0.0
    %826 = vmatpush2.msra.mxu0 0.0
    %827 = vmatprep.subr.mxu0 0.0
    %828 = vmatpush2.msra.mxu0 0.0
    %829 = vmatprep.subr.mxu0 0.0
    %830 = vmatpush2.msra.mxu0 0.0
    %831 = vmatprep.subr.mxu0 0.0
    %832 = vmatpush2.msra.mxu0 0.0
    %833 = vmatprep.subr.mxu0 0.0
    %834 = vmatpush2.msra.mxu0 0.0
    %835 = vmatprep.subr.mxu0 0.0
    %836 = vmatpush2.msra.mxu0 0.0
    %837 = vmatprep.subr.mxu0 0.0
    %838 = vmatpush2.msra.mxu0 0.0
    %839 = vmatprep.subr.mxu0 0.0
    %840 = vmatpush2.msra.mxu0 0.0
    %841 = vmatprep.subr.mxu0 0.0
    %842 = vmatpush2.msra.mxu0 0.0
    %843 = vmatprep.subr.mxu0 0.0
    %844 = vmatpush2.msra.mxu0 0.0
    %845 = vmatprep.subr.mxu0 0.0
    %846 = vmatpush2.msra.mxu0 0.0
    %847 = vmatprep.subr.mxu0 0.0
    %848 = vmatpush2.msra.mxu0 0.0
    %849 = vmatprep.subr.mxu0 0.0
    %850 = vmatpush2.msra.mxu0 0.0
    %851 = vmatprep.subr.mxu0 0.0
    %852 = vmatpush2.msra.mxu0 0.0
    %853 = vmatprep.subr.mxu0 0.0
    %854 = vmatpush2.msra.mxu0 0.0
    %855 = vmatprep.subr.mxu0 0.0
    %856 = vmatpush2.msra.mxu0 0.0
    %857 = vmatprep.mubr.f32.mxu0 0.0
    %858 = vmatmul.mubr.f32.gmra.mxu0 %v791
    %v859 = vpop.f32.mrf.mxu0
    %v860 = vadd.f32 0.0, %v859
    %v861 = vpop.f32.mrf.mxu0
    %862 = vdwg.mxu0
    %v863 = vadd.f32 %v624, %v860
    %864 = vrot.lane.b32.xlu0 %v132, 104
    %v865 = vpop.permute.xlu0 %864
    %866 = vrot.lane.b32.xlu0 %v142, 72
    %v867 = vpop.permute.xlu0 %866
    %v868 = vsel %vm157, %v865, 0
    %v870 = vsel %vm157, %v867, 0
    %872 = vmatprep.subr.mxu0 0.0
    %873 = vmatpush1.xpose.msra.mxu0 0.0
    %874 = vmatprep.subr.mxu0 0.0
    %875 = vmatpush1.xpose.msra.mxu0 0.0
    %876 = vmatprep.subr.mxu0 0.0
    %877 = vmatpush1.xpose.msra.mxu0 0.0
    %878 = vmatprep.subr.mxu0 0.0
    %879 = vmatpush1.xpose.msra.mxu0 0.0
    %880 = vmatprep.subr.mxu0 0.0
    %881 = vmatpush1.xpose.msra.mxu0 0.0
    %882 = vmatprep.subr.mxu0 0.0
    %883 = vmatpush1.xpose.msra.mxu0 0.0
    %884 = vmatprep.subr.mxu0 0.0
    %885 = vmatpush1.xpose.msra.mxu0 0.0
    %886 = vmatprep.subr.mxu0 0.0
    %887 = vmatpush1.xpose.msra.mxu0 0.0
    %888 = vmatprep.subr.mxu0 0.0
    %889 = vmatpush1.xpose.msra.mxu0 0.0
    %890 = vmatprep.subr.mxu0 0.0
    %891 = vmatpush1.xpose.msra.mxu0 0.0
    %892 = vmatprep.subr.mxu0 0.0
    %893 = vmatpush1.xpose.msra.mxu0 0.0
    %894 = vmatprep.subr.mxu0 0.0
    %895 = vmatpush1.xpose.msra.mxu0 0.0
    %896 = vmatprep.subr.mxu0 0.0
    %897 = vmatpush1.xpose.msra.mxu0 0.0
    %898 = vmatprep.subr.mxu0 0.0
    %899 = vmatpush1.xpose.msra.mxu0 0.0
    %900 = vmatprep.subr.mxu0 0.0
    %901 = vmatpush1.xpose.msra.mxu0 0.0
    %902 = vmatprep.subr.mxu0 0.0
    %903 = vmatpush1.xpose.msra.mxu0 %v870
    %904 = vmatprep.subr.mxu0 0.0
    %905 = vmatpush2.xpose.msra.mxu0 0.0
    %906 = vmatprep.subr.mxu0 0.0
    %907 = vmatpush2.xpose.msra.mxu0 0.0
    %908 = vmatprep.subr.mxu0 0.0
    %909 = vmatpush2.xpose.msra.mxu0 0.0
    %910 = vmatprep.subr.mxu0 0.0
    %911 = vmatpush2.xpose.msra.mxu0 0.0
    %912 = vmatprep.subr.mxu0 0.0
    %913 = vmatpush2.xpose.msra.mxu0 0.0
    %914 = vmatprep.subr.mxu0 0.0
    %915 = vmatpush2.xpose.msra.mxu0 0.0
    %916 = vmatprep.subr.mxu0 0.0
    %917 = vmatpush2.xpose.msra.mxu0 0.0
    %918 = vmatprep.subr.mxu0 0.0
    %919 = vmatpush2.xpose.msra.mxu0 0.0
    %920 = vmatprep.subr.mxu0 0.0
    %921 = vmatpush2.xpose.msra.mxu0 0.0
    %922 = vmatprep.subr.mxu0 0.0
    %923 = vmatpush2.xpose.msra.mxu0 0.0
    %924 = vmatprep.subr.mxu0 0.0
    %925 = vmatpush2.xpose.msra.mxu0 0.0
    %926 = vmatprep.subr.mxu0 0.0
    %927 = vmatpush2.xpose.msra.mxu0 0.0
    %928 = vmatprep.subr.mxu0 0.0
    %929 = vmatpush2.xpose.msra.mxu0 0.0
    %930 = vmatprep.subr.mxu0 0.0
    %931 = vmatpush2.xpose.msra.mxu0 0.0
    %932 = vmatprep.subr.mxu0 0.0
    %933 = vmatpush2.xpose.msra.mxu0 0.0
    %934 = vmatprep.subr.mxu0 0.0
    %935 = vmatpush2.xpose.msra.mxu0 0.0
    %936 = vmatprep.mubr.f32.mxu0 0.0
    %937 = vmatmul.mubr.f32.gmra.mxu0 %v868
    %v938 = vpop.f32.mrf.mxu0
    %v939 = vadd.f32 %v152, %v938
    %v940 = vpop.f32.mrf.mxu0
    %941 = vdwg.mxu0
    %v942 = vsel %vm157, %v939, -inf
    %943 = vmax.xlane.f32.xlu0 %v942
    %v944 = vpop.xlane.xlu0 %943
    %v945 = vsub.f32 %v939, %v944
    %v946 = vmul.f32 %v945, 1.442695
    %v947 = vpow.pop %v946
    %v948 = vsel %vm157, %v947, 0.0
    %949 = vadd.xlane.f32.xlu0 %v948
    %v950 = vpop.xlane.xlu0 %949
    %v951 = vrcp.pop %v950
    %v952 = vmul.f32 %v947, %v951
    %v955 = vsel %vm157, %v952, 0
    %957 = vmatprep.subr.mxu0 0.0
    %958 = vmatpush1.msra.mxu0 0.0
    %959 = vmatprep.subr.mxu0 0.0
    %960 = vmatpush1.msra.mxu0 0.0
    %961 = vmatprep.subr.mxu0 0.0
    %962 = vmatpush1.msra.mxu0 0.0
    %963 = vmatprep.subr.mxu0 0.0
    %964 = vmatpush1.msra.mxu0 0.0
    %965 = vmatprep.subr.mxu0 0.0
    %966 = vmatpush1.msra.mxu0 0.0
    %967 = vmatprep.subr.mxu0 0.0
    %968 = vmatpush1.msra.mxu0 0.0
    %969 = vmatprep.subr.mxu0 0.0
    %970 = vmatpush1.msra.mxu0 0.0
    %971 = vmatprep.subr.mxu0 0.0
    %972 = vmatpush1.msra.mxu0 0.0
    %973 = vmatprep.subr.mxu0 0.0
    %974 = vmatpush1.msra.mxu0 0.0
    %975 = vmatprep.subr.mxu0 0.0
    %976 = vmatpush1.msra.mxu0 0.0
    %977 = vmatprep.subr.mxu0 0.0
    %978 = vmatpush1.msra.mxu0 0.0
    %979 = vmatprep.subr.mxu0 0.0
    %980 = vmatpush1.msra.mxu0 0.0
    %981 = vmatprep.subr.mxu0 0.0
    %982 = vmatpush1.msra.mxu0 0.0
    %983 = vmatprep.subr.mxu0 0.0
    %984 = vmatpush1.msra.mxu0 0.0
    %985 = vmatprep.subr.mxu0 0.0
    %986 = vmatpush1.msra.mxu0 0.0
    %987 = vmatprep.subr.mxu0 0.0
    %988 = vmatpush1.msra.mxu0 %v867
    %989 = vmatprep.subr.mxu0 0.0
    %990 = vmatpush2.msra.mxu0 0.0
    %991 = vmatprep.subr.mxu0 0.0
    %992 = vmatpush2.msra.mxu0 0.0
    %993 = vmatprep.subr.mxu0 0.0
    %994 = vmatpush2.msra.mxu0 0.0
    %995 = vmatprep.subr.mxu0 0.0
    %996 = vmatpush2.msra.mxu0 0.0
    %997 = vmatprep.subr.mxu0 0.0
    %998 = vmatpush2.msra.mxu0 0.0
    %999 = vmatprep.subr.mxu0 0.0
    %1000 = vmatpush2.msra.mxu0 0.0
    %1001 = vmatprep.subr.mxu0 0.0
    %1002 = vmatpush2.msra.mxu0 0.0
    %1003 = vmatprep.subr.mxu0 0.0
    %1004 = vmatpush2.msra.mxu0 0.0
    %1005 = vmatprep.subr.mxu0 0.0
    %1006 = vmatpush2.msra.mxu0 0.0
    %1007 = vmatprep.subr.mxu0 0.0
    %1008 = vmatpush2.msra.mxu0 0.0
    %1009 = vmatprep.subr.mxu0 0.0
    %1010 = vmatpush2.msra.mxu0 0.0
    %1011 = vmatprep.subr.mxu0 0.0
    %1012 = vmatpush2.msra.mxu0 0.0
    %1013 = vmatprep.subr.mxu0 0.0
    %1014 = vmatpush2.msra.mxu0 0.0
    %1015 = vmatprep.subr.mxu0 0.0
    %1016 = vmatpush2.msra.mxu0 0.0
    %1017 = vmatprep.subr.mxu0 0.0
    %1018 = vmatpush2.msra.mxu0 0.0
    %1019 = vmatprep.subr.mxu0 0.0
    %1020 = vmatpush2.msra.mxu0 0.0
    %1021 = vmatprep.mubr.f32.mxu0 0.0
    %1022 = vmatmul.mubr.f32.gmra.mxu0 %v955
    %v1023 = vpop.f32.mrf.mxu0
    %v1024 = vadd.f32 0.0, %v1023
    %v1025 = vpop.f32.mrf.mxu0
    %1026 = vdwg.mxu0
    %v1028 = vsel %vm157, %v1024, 0
    %1030 = vmatprep.subr.mxu0 0.0
    %1031 = vmatpush1.msra.mxu0 0.0
    %1032 = vmatprep.subr.mxu0 0.0
    %1033 = vmatpush1.msra.mxu0 0.0
    %1034 = vmatprep.subr.mxu0 0.0
    %1035 = vmatpush1.msra.mxu0 0.0
    %1036 = vmatprep.subr.mxu0 0.0
    %1037 = vmatpush1.msra.mxu0 0.0
    %1038 = vmatprep.subr.mxu0 0.0
    %1039 = vmatpush1.msra.mxu0 0.0
    %1040 = vmatprep.subr.mxu0 0.0
    %1041 = vmatpush1.msra.mxu0 0.0
    %1042 = vmatprep.subr.mxu0 0.0
    %1043 = vmatpush1.msra.mxu0 0.0
    %1044 = vmatprep.subr.mxu0 0.0
    %1045 = vmatpush1.msra.mxu0 0.0
    %1046 = vmatprep.subr.mxu0 0.0
    %1047 = vmatpush1.msra.mxu0 0.0
    %1048 = vmatprep.subr.mxu0 0.0
    %1049 = vmatpush1.msra.mxu0 0.0
    %1050 = vmatprep.subr.mxu0 0.0
    %1051 = vmatpush1.msra.mxu0 0.0
    %1052 = vmatprep.subr.mxu0 0.0
    %1053 = vmatpush1.msra.mxu0 0.0
    %1054 = vmatprep.subr.mxu0 0.0
    %1055 = vmatpush1.msra.mxu0 0.0
    %1056 = vmatprep.subr.mxu0 0.0
    %1057 = vmatpush1.msra.mxu0 0.0
    %1058 = vmatprep.subr.mxu0 0.0
    %1059 = vmatpush1.msra.mxu0 0.0
    %1060 = vmatprep.subr.mxu0 0.0
    %1061 = vmatpush1.msra.mxu0 %v39
    %1062 = vmatprep.subr.mxu0 0.0
    %1063 = vmatpush2.msra.mxu0 0.0
    %1064 = vmatprep.subr.mxu0 0.0
    %1065 = vmatpush2.msra.mxu0 0.0
    %1066 = vmatprep.subr.mxu0 0.0
    %1067 = vmatpush2.msra.mxu0 0.0
    %1068 = vmatprep.subr.mxu0 0.0
    %1069 = vmatpush2.msra.mxu0 0.0
    %1070 = vmatprep.subr.mxu0 0.0
    %1071 = vmatpush2.msra.mxu0 0.0
    %1072 = vmatprep.subr.mxu0 0.0
    %1073 = vmatpush2.msra.mxu0 0.0
    %1074 = vmatprep.subr.mxu0 0.0
    %1075 = vmatpush2.msra.mxu0 0.0
    %1076 = vmatprep.subr.mxu0 0.0
    %1077 = vmatpush2.msra.mxu0 0.0
    %1078 = vmatprep.subr.mxu0 0.0
    %1079 = vmatpush2.msra.mxu0 0.0
    %1080 = vmatprep.subr.mxu0 0.0
    %1081 = vmatpush2.msra.mxu0 0.0
    %1082 = vmatprep.subr.mxu0 0.0
    %1083 = vmatpush2.msra.mxu0 0.0
    %1084 = vmatprep.subr.mxu0 0.0
    %1085 = vmatpush2.msra.mxu0 0.0
    %1086 = vmatprep.subr.mxu0 0.0
    %1087 = vmatpush2.msra.mxu0 0.0
    %1088 = vmatprep.subr.mxu0 0.0
    %1089 = vmatpush2.msra.mxu0 0.0
    %1090 = vmatprep.subr.mxu0 0.0
    %1091 = vmatpush2.msra.mxu0 0.0
    %1092 = vmatprep.subr.mxu0 0.0
    %1093 = vmatpush2.msra.mxu0 0.0
    %1094 = vmatprep.mubr.f32.mxu0 0.0
    %1095 = vmatmul.mubr.f32.gmra.mxu0 %v1028
    %v1096 = vpop.f32.mrf.mxu0
    %v1097 = vadd.f32 0.0, %v1096
    %v1098 = vpop.f32.mrf.mxu0
    %1099 = vdwg.mxu0
    %v1100 = vadd.f32 %v863, %v1097
    %v1102 = vlaneseq
    %v1103 = vshrl.u32 %v1102, 7
    %v1104 = vsub.s32 0, %v1103
    %v1105 = vrot.slane %v147, %v1104
    %1108 = vrot.lane.b32.xlu0 %v143, 96
    %v1109 = vpop.permute.xlu0 %1108
    %v1111 = vsel %vm157, %v133, 0
    %v1113 = vsel %vm157, %v1109, 0
    %1115 = vmatprep.subr.mxu0 0.0
    %1116 = vmatpush1.xpose.msra.mxu0 0.0
    %1117 = vmatprep.subr.mxu0 0.0
    %1118 = vmatpush1.xpose.msra.mxu0 0.0
    %1119 = vmatprep.subr.mxu0 0.0
    %1120 = vmatpush1.xpose.msra.mxu0 0.0
    %1121 = vmatprep.subr.mxu0 0.0
    %1122 = vmatpush1.xpose.msra.mxu0 0.0
    %1123 = vmatprep.subr.mxu0 0.0
    %1124 = vmatpush1.xpose.msra.mxu0 0.0
    %1125 = vmatprep.subr.mxu0 0.0
    %1126 = vmatpush1.xpose.msra.mxu0 0.0
    %1127 = vmatprep.subr.mxu0 0.0
    %1128 = vmatpush1.xpose.msra.mxu0 0.0
    %1129 = vmatprep.subr.mxu0 0.0
    %1130 = vmatpush1.xpose.msra.mxu0 0.0
    %1131 = vmatprep.subr.mxu0 0.0
    %1132 = vmatpush1.xpose.msra.mxu0 0.0
    %1133 = vmatprep.subr.mxu0 0.0
    %1134 = vmatpush1.xpose.msra.mxu0 0.0
    %1135 = vmatprep.subr.mxu0 0.0
    %1136 = vmatpush1.xpose.msra.mxu0 0.0
    %1137 = vmatprep.subr.mxu0 0.0
    %1138 = vmatpush1.xpose.msra.mxu0 0.0
    %1139 = vmatprep.subr.mxu0 0.0
    %1140 = vmatpush1.xpose.msra.mxu0 0.0
    %1141 = vmatprep.subr.mxu0 0.0
    %1142 = vmatpush1.xpose.msra.mxu0 0.0
    %1143 = vmatprep.subr.mxu0 0.0
    %1144 = vmatpush1.xpose.msra.mxu0 0.0
    %1145 = vmatprep.subr.mxu0 0.0
    %1146 = vmatpush1.xpose.msra.mxu0 %v1113
    %1147 = vmatprep.subr.mxu0 0.0
    %1148 = vmatpush2.xpose.msra.mxu0 0.0
    %1149 = vmatprep.subr.mxu0 0.0
    %1150 = vmatpush2.xpose.msra.mxu0 0.0
    %1151 = vmatprep.subr.mxu0 0.0
    %1152 = vmatpush2.xpose.msra.mxu0 0.0
    %1153 = vmatprep.subr.mxu0 0.0
    %1154 = vmatpush2.xpose.msra.mxu0 0.0
    %1155 = vmatprep.subr.mxu0 0.0
    %1156 = vmatpush2.xpose.msra.mxu0 0.0
    %1157 = vmatprep.subr.mxu0 0.0
    %1158 = vmatpush2.xpose.msra.mxu0 0.0
    %1159 = vmatprep.subr.mxu0 0.0
    %1160 = vmatpush2.xpose.msra.mxu0 0.0
    %1161 = vmatprep.subr.mxu0 0.0
    %1162 = vmatpush2.xpose.msra.mxu0 0.0
    %1163 = vmatprep.subr.mxu0 0.0
    %1164 = vmatpush2.xpose.msra.mxu0 0.0
    %1165 = vmatprep.subr.mxu0 0.0
    %1166 = vmatpush2.xpose.msra.mxu0 0.0
    %1167 = vmatprep.subr.mxu0 0.0
    %1168 = vmatpush2.xpose.msra.mxu0 0.0
    %1169 = vmatprep.subr.mxu0 0.0
    %1170 = vmatpush2.xpose.msra.mxu0 0.0
    %1171 = vmatprep.subr.mxu0 0.0
    %1172 = vmatpush2.xpose.msra.mxu0 0.0
    %1173 = vmatprep.subr.mxu0 0.0
    %1174 = vmatpush2.xpose.msra.mxu0 0.0
    %1175 = vmatprep.subr.mxu0 0.0
    %1176 = vmatpush2.xpose.msra.mxu0 0.0
    %1177 = vmatprep.subr.mxu0 0.0
    %1178 = vmatpush2.xpose.msra.mxu0 0.0
    %1179 = vmatprep.mubr.f32.mxu0 0.0
    %1180 = vmatmul.mubr.f32.gmra.mxu0 %v1111
    %v1181 = vpop.f32.mrf.mxu0
    %v1182 = vadd.f32 %v1105, %v1181
    %v1183 = vpop.f32.mrf.mxu0
    %1184 = vdwg.mxu0
    %v1185 = vsel %vm157, %v1182, -inf
    %1186 = vmax.xlane.f32.xlu0 %v1185
    %v1187 = vpop.xlane.xlu0 %1186
    %v1188 = vsub.f32 %v1182, %v1187
    %v1189 = vmul.f32 %v1188, 1.442695
    %v1190 = vpow.pop %v1189
    %v1191 = vsel %vm157, %v1190, 0.0
    %1192 = vadd.xlane.f32.xlu0 %v1191
    %v1193 = vpop.xlane.xlu0 %1192
    %v1194 = vrcp.pop %v1193
    %v1195 = vmul.f32 %v1190, %v1194
    %v1198 = vsel %vm157, %v1195, 0
    %1200 = vmatprep.subr.mxu0 0.0
    %1201 = vmatpush1.msra.mxu0 0.0
    %1202 = vmatprep.subr.mxu0 0.0
    %1203 = vmatpush1.msra.mxu0 0.0
    %1204 = vmatprep.subr.mxu0 0.0
    %1205 = vmatpush1.msra.mxu0 0.0
    %1206 = vmatprep.subr.mxu0 0.0
    %1207 = vmatpush1.msra.mxu0 0.0
    %1208 = vmatprep.subr.mxu0 0.0
    %1209 = vmatpush1.msra.mxu0 0.0
    %1210 = vmatprep.subr.mxu0 0.0
    %1211 = vmatpush1.msra.mxu0 0.0
    %1212 = vmatprep.subr.mxu0 0.0
    %1213 = vmatpush1.msra.mxu0 0.0
    %1214 = vmatprep.subr.mxu0 0.0
    %1215 = vmatpush1.msra.mxu0 0.0
    %1216 = vmatprep.subr.mxu0 0.0
    %1217 = vmatpush1.msra.mxu0 0.0
    %1218 = vmatprep.subr.mxu0 0.0
    %1219 = vmatpush1.msra.mxu0 0.0
    %1220 = vmatprep.subr.mxu0 0.0
    %1221 = vmatpush1.msra.mxu0 0.0
    %1222 = vmatprep.subr.mxu0 0.0
    %1223 = vmatpush1.msra.mxu0 0.0
    %1224 = vmatprep.subr.mxu0 0.0
    %1225 = vmatpush1.msra.mxu0 0.0
    %1226 = vmatprep.subr.mxu0 0.0
    %1227 = vmatpush1.msra.mxu0 0.0
    %1228 = vmatprep.subr.mxu0 0.0
    %1229 = vmatpush1.msra.mxu0 0.0
    %1230 = vmatprep.subr.mxu0 0.0
    %1231 = vmatpush1.msra.mxu0 %v1109
    %1232 = vmatprep.subr.mxu0 0.0
    %1233 = vmatpush2.msra.mxu0 0.0
    %1234 = vmatprep.subr.mxu0 0.0
    %1235 = vmatpush2.msra.mxu0 0.0
    %1236 = vmatprep.subr.mxu0 0.0
    %1237 = vmatpush2.msra.mxu0 0.0
    %1238 = vmatprep.subr.mxu0 0.0
    %1239 = vmatpush2.msra.mxu0 0.0
    %1240 = vmatprep.subr.mxu0 0.0
    %1241 = vmatpush2.msra.mxu0 0.0
    %1242 = vmatprep.subr.mxu0 0.0
    %1243 = vmatpush2.msra.mxu0 0.0
    %1244 = vmatprep.subr.mxu0 0.0
    %1245 = vmatpush2.msra.mxu0 0.0
    %1246 = vmatprep.subr.mxu0 0.0
    %1247 = vmatpush2.msra.mxu0 0.0
    %1248 = vmatprep.subr.mxu0 0.0
    %1249 = vmatpush2.msra.mxu0 0.0
    %1250 = vmatprep.subr.mxu0 0.0
    %1251 = vmatpush2.msra.mxu0 0.0
    %1252 = vmatprep.subr.mxu0 0.0
    %1253 = vmatpush2.msra.mxu0 0.0
    %1254 = vmatprep.subr.mxu0 0.0
    %1255 = vmatpush2.msra.mxu0 0.0
    %1256 = vmatprep.subr.mxu0 0.0
    %1257 = vmatpush2.msra.mxu0 0.0
    %1258 = vmatprep.subr.mxu0 0.0
    %1259 = vmatpush2.msra.mxu0 0.0
    %1260 = vmatprep.subr.mxu0 0.0
    %1261 = vmatpush2.msra.mxu0 0.0
    %1262 = vmatprep.subr.mxu0 0.0
    %1263 = vmatpush2.msra.mxu0 0.0
    %1264 = vmatprep.mubr.f32.mxu0 0.0
    %1265 = vmatmul.mubr.f32.gmra.mxu0 %v1198
    %v1266 = vpop.f32.mrf.mxu0
    %v1267 = vadd.f32 0.0, %v1266
    %v1268 = vpop.f32.mrf.mxu0
    %1269 = vdwg.mxu0
    %1270 = vrot.lane.b32.xlu0 %v133, 120
    %v1271 = vpop.permute.xlu0 %1270
    %1272 = vrot.lane.b32.xlu0 %v143, 88
    %v1273 = vpop.permute.xlu0 %1272
    %v1274 = vsel %vm157, %v1271, 0
    %v1276 = vsel %vm157, %v1273, 0
    %1278 = vmatprep.subr.mxu0 0.0
    %1279 = vmatpush1.xpose.msra.mxu0 0.0
    %1280 = vmatprep.subr.mxu0 0.0
    %1281 = vmatpush1.xpose.msra.mxu0 0.0
    %1282 = vmatprep.subr.mxu0 0.0
    %1283 = vmatpush1.xpose.msra.mxu0 0.0
    %1284 = vmatprep.subr.mxu0 0.0
    %1285 = vmatpush1.xpose.msra.mxu0 0.0
    %1286 = vmatprep.subr.mxu0 0.0
    %1287 = vmatpush1.xpose.msra.mxu0 0.0
    %1288 = vmatprep.subr.mxu0 0.0
    %1289 = vmatpush1.xpose.msra.mxu0 0.0
    %1290 = vmatprep.subr.mxu0 0.0
    %1291 = vmatpush1.xpose.msra.mxu0 0.0
    %1292 = vmatprep.subr.mxu0 0.0
    %1293 = vmatpush1.xpose.msra.mxu0 0.0
    %1294 = vmatprep.subr.mxu0 0.0
    %1295 = vmatpush1.xpose.msra.mxu0 0.0
    %1296 = vmatprep.subr.mxu0 0.0
    %1297 = vmatpush1.xpose.msra.mxu0 0.0
    %1298 = vmatprep.subr.mxu0 0.0
    %1299 = vmatpush1.xpose.msra.mxu0 0.0
    %1300 = vmatprep.subr.mxu0 0.0
    %1301 = vmatpush1.xpose.msra.mxu0 0.0
    %1302 = vmatprep.subr.mxu0 0.0
    %1303 = vmatpush1.xpose.msra.mxu0 0.0
    %1304 = vmatprep.subr.mxu0 0.0
    %1305 = vmatpush1.xpose.msra.mxu0 0.0
    %1306 = vmatprep.subr.mxu0 0.0
    %1307 = vmatpush1.xpose.msra.mxu0 0.0
    %1308 = vmatprep.subr.mxu0 0.0
    %1309 = vmatpush1.xpose.msra.mxu0 %v1276
    %1310 = vmatprep.subr.mxu0 0.0
    %1311 = vmatpush2.xpose.msra.mxu0 0.0
    %1312 = vmatprep.subr.mxu0 0.0
    %1313 = vmatpush2.xpose.msra.mxu0 0.0
    %1314 = vmatprep.subr.mxu0 0.0
    %1315 = vmatpush2.xpose.msra.mxu0 0.0
    %1316 = vmatprep.subr.mxu0 0.0
    %1317 = vmatpush2.xpose.msra.mxu0 0.0
    %1318 = vmatprep.subr.mxu0 0.0
    %1319 = vmatpush2.xpose.msra.mxu0 0.0
    %1320 = vmatprep.subr.mxu0 0.0
    %1321 = vmatpush2.xpose.msra.mxu0 0.0
    %1322 = vmatprep.subr.mxu0 0.0
    %1323 = vmatpush2.xpose.msra.mxu0 0.0
    %1324 = vmatprep.subr.mxu0 0.0
    %1325 = vmatpush2.xpose.msra.mxu0 0.0
    %1326 = vmatprep.subr.mxu0 0.0
    %1327 = vmatpush2.xpose.msra.mxu0 0.0
    %1328 = vmatprep.subr.mxu0 0.0
    %1329 = vmatpush2.xpose.msra.mxu0 0.0
    %1330 = vmatprep.subr.mxu0 0.0
    %1331 = vmatpush2.xpose.msra.mxu0 0.0
    %1332 = vmatprep.subr.mxu0 0.0
    %1333 = vmatpush2.xpose.msra.mxu0 0.0
    %1334 = vmatprep.subr.mxu0 0.0
    %1335 = vmatpush2.xpose.msra.mxu0 0.0
    %1336 = vmatprep.subr.mxu0 0.0
    %1337 = vmatpush2.xpose.msra.mxu0 0.0
    %1338 = vmatprep.subr.mxu0 0.0
    %1339 = vmatpush2.xpose.msra.mxu0 0.0
    %1340 = vmatprep.subr.mxu0 0.0
    %1341 = vmatpush2.xpose.msra.mxu0 0.0
    %1342 = vmatprep.mubr.f32.mxu0 0.0
    %1343 = vmatmul.mubr.f32.gmra.mxu0 %v1274
    %v1344 = vpop.f32.mrf.mxu0
    %v1345 = vadd.f32 %v1105, %v1344
    %v1346 = vpop.f32.mrf.mxu0
    %1347 = vdwg.mxu0
    %v1348 = vsel %vm157, %v1345, -inf
    %1349 = vmax.xlane.f32.xlu0 %v1348
    %v1350 = vpop.xlane.xlu0 %1349
    %v1351 = vsub.f32 %v1345, %v1350
    %v1352 = vmul.f32 %v1351, 1.442695
    %v1353 = vpow.pop %v1352
    %v1354 = vsel %vm157, %v1353, 0.0
    %1355 = vadd.xlane.f32.xlu0 %v1354
    %v1356 = vpop.xlane.xlu0 %1355
    %v1357 = vrcp.pop %v1356
    %v1358 = vmul.f32 %v1353, %v1357
    %v1361 = vsel %vm157, %v1358, 0
    %1363 = vmatprep.subr.mxu0 0.0
    %1364 = vmatpush1.msra.mxu0 0.0
    %1365 = vmatprep.subr.mxu0 0.0
    %1366 = vmatpush1.msra.mxu0 0.0
    %1367 = vmatprep.subr.mxu0 0.0
    %1368 = vmatpush1.msra.mxu0 0.0
    %1369 = vmatprep.subr.mxu0 0.0
    %1370 = vmatpush1.msra.mxu0 0.0
    %1371 = vmatprep.subr.mxu0 0.0
    %1372 = vmatpush1.msra.mxu0 0.0
    %1373 = vmatprep.subr.mxu0 0.0
    %1374 = vmatpush1.msra.mxu0 0.0
    %1375 = vmatprep.subr.mxu0 0.0
    %1376 = vmatpush1.msra.mxu0 0.0
    %1377 = vmatprep.subr.mxu0 0.0
    %1378 = vmatpush1.msra.mxu0 0.0
    %1379 = vmatprep.subr.mxu0 0.0
    %1380 = vmatpush1.msra.mxu0 0.0
    %1381 = vmatprep.subr.mxu0 0.0
    %1382 = vmatpush1.msra.mxu0 0.0
    %1383 = vmatprep.subr.mxu0 0.0
    %1384 = vmatpush1.msra.mxu0 0.0
    %1385 = vmatprep.subr.mxu0 0.0
    %1386 = vmatpush1.msra.mxu0 0.0
    %1387 = vmatprep.subr.mxu0 0.0
    %1388 = vmatpush1.msra.mxu0 0.0
    %1389 = vmatprep.subr.mxu0 0.0
    %1390 = vmatpush1.msra.mxu0 0.0
    %1391 = vmatprep.subr.mxu0 0.0
    %1392 = vmatpush1.msra.mxu0 0.0
    %1393 = vmatprep.subr.mxu0 0.0
    %1394 = vmatpush1.msra.mxu0 %v1273
    %1395 = vmatprep.subr.mxu0 0.0
    %1396 = vmatpush2.msra.mxu0 0.0
    %1397 = vmatprep.subr.mxu0 0.0
    %1398 = vmatpush2.msra.mxu0 0.0
    %1399 = vmatprep.subr.mxu0 0.0
    %1400 = vmatpush2.msra.mxu0 0.0
    %1401 = vmatprep.subr.mxu0 0.0
    %1402 = vmatpush2.msra.mxu0 0.0
    %1403 = vmatprep.subr.mxu0 0.0
    %1404 = vmatpush2.msra.mxu0 0.0
    %1405 = vmatprep.subr.mxu0 0.0
    %1406 = vmatpush2.msra.mxu0 0.0
    %1407 = vmatprep.subr.mxu0 0.0
    %1408 = vmatpush2.msra.mxu0 0.0
    %1409 = vmatprep.subr.mxu0 0.0
    %1410 = vmatpush2.msra.mxu0 0.0
    %1411 = vmatprep.subr.mxu0 0.0
    %1412 = vmatpush2.msra.mxu0 0.0
    %1413 = vmatprep.subr.mxu0 0.0
    %1414 = vmatpush2.msra.mxu0 0.0
    %1415 = vmatprep.subr.mxu0 0.0
    %1416 = vmatpush2.msra.mxu0 0.0
    %1417 = vmatprep.subr.mxu0 0.0
    %1418 = vmatpush2.msra.mxu0 0.0
    %1419 = vmatprep.subr.mxu0 0.0
    %1420 = vmatpush2.msra.mxu0 0.0
    %1421 = vmatprep.subr.mxu0 0.0
    %1422 = vmatpush2.msra.mxu0 0.0
    %1423 = vmatprep.subr.mxu0 0.0
    %1424 = vmatpush2.msra.mxu0 0.0
    %1425 = vmatprep.subr.mxu0 0.0
    %1426 = vmatpush2.msra.mxu0 0.0
    %1427 = vmatprep.mubr.f32.mxu0 0.0
    %1428 = vmatmul.mubr.f32.gmra.mxu0 %v1361
    %v1429 = vpop.f32.mrf.mxu0
    %v1430 = vadd.f32 0.0, %v1429
    %v1431 = vpop.f32.mrf.mxu0
    %1432 = vdwg.mxu0
    %v1434 = vsel %vm157, %v1430, 0
    %1436 = vmatprep.subr.mxu0 0.0
    %1437 = vmatpush1.msra.mxu0 0.0
    %1438 = vmatprep.subr.mxu0 0.0
    %1439 = vmatpush1.msra.mxu0 0.0
    %1440 = vmatprep.subr.mxu0 0.0
    %1441 = vmatpush1.msra.mxu0 0.0
    %1442 = vmatprep.subr.mxu0 0.0
    %1443 = vmatpush1.msra.mxu0 0.0
    %1444 = vmatprep.subr.mxu0 0.0
    %1445 = vmatpush1.msra.mxu0 0.0
    %1446 = vmatprep.subr.mxu0 0.0
    %1447 = vmatpush1.msra.mxu0 0.0
    %1448 = vmatprep.subr.mxu0 0.0
    %1449 = vmatpush1.msra.mxu0 0.0
    %1450 = vmatprep.subr.mxu0 0.0
    %1451 = vmatpush1.msra.mxu0 0.0
    %1452 = vmatprep.subr.mxu0 0.0
    %1453 = vmatpush1.msra.mxu0 0.0
    %1454 = vmatprep.subr.mxu0 0.0
    %1455 = vmatpush1.msra.mxu0 0.0
    %1456 = vmatprep.subr.mxu0 0.0
    %1457 = vmatpush1.msra.mxu0 0.0
    %1458 = vmatprep.subr.mxu0 0.0
    %1459 = vmatpush1.msra.mxu0 0.0
    %1460 = vmatprep.subr.mxu0 0.0
    %1461 = vmatpush1.msra.mxu0 0.0
    %1462 = vmatprep.subr.mxu0 0.0
    %1463 = vmatpush1.msra.mxu0 0.0
    %1464 = vmatprep.subr.mxu0 0.0
    %1465 = vmatpush1.msra.mxu0 0.0
    %1466 = vmatprep.subr.mxu0 0.0
    %1467 = vmatpush1.msra.mxu0 %v37
    %1468 = vmatprep.subr.mxu0 0.0
    %1469 = vmatpush2.msra.mxu0 0.0
    %1470 = vmatprep.subr.mxu0 0.0
    %1471 = vmatpush2.msra.mxu0 0.0
    %1472 = vmatprep.subr.mxu0 0.0
    %1473 = vmatpush2.msra.mxu0 0.0
    %1474 = vmatprep.subr.mxu0 0.0
    %1475 = vmatpush2.msra.mxu0 0.0
    %1476 = vmatprep.subr.mxu0 0.0
    %1477 = vmatpush2.msra.mxu0 0.0
    %1478 = vmatprep.subr.mxu0 0.0
    %1479 = vmatpush2.msra.mxu0 0.0
    %1480 = vmatprep.subr.mxu0 0.0
    %1481 = vmatpush2.msra.mxu0 0.0
    %1482 = vmatprep.subr.mxu0 0.0
    %1483 = vmatpush2.msra.mxu0 0.0
    %1484 = vmatprep.subr.mxu0 0.0
    %1485 = vmatpush2.msra.mxu0 0.0
    %1486 = vmatprep.subr.mxu0 0.0
    %1487 = vmatpush2.msra.mxu0 0.0
    %1488 = vmatprep.subr.mxu0 0.0
    %1489 = vmatpush2.msra.mxu0 0.0
    %1490 = vmatprep.subr.mxu0 0.0
    %1491 = vmatpush2.msra.mxu0 0.0
    %1492 = vmatprep.subr.mxu0 0.0
    %1493 = vmatpush2.msra.mxu0 0.0
    %1494 = vmatprep.subr.mxu0 0.0
    %1495 = vmatpush2.msra.mxu0 0.0
    %1496 = vmatprep.subr.mxu0 0.0
    %1497 = vmatpush2.msra.mxu0 0.0
    %1498 = vmatprep.subr.mxu0 0.0
    %1499 = vmatpush2.msra.mxu0 0.0
    %1500 = vmatprep.mubr.f32.mxu0 0.0
    %1501 = vmatmul.mubr.f32.gmra.mxu0 %v1434
    %v1502 = vpop.f32.mrf.mxu0
    %v1503 = vadd.f32 0.0, %v1502
    %v1504 = vpop.f32.mrf.mxu0
    %1505 = vdwg.mxu0
    %v1507 = vsel %vm157, %v1267, 0
    %1509 = vmatprep.subr.mxu0 0.0
    %1510 = vmatpush1.msra.mxu0 0.0
    %1511 = vmatprep.subr.mxu0 0.0
    %1512 = vmatpush1.msra.mxu0 0.0
    %1513 = vmatprep.subr.mxu0 0.0
    %1514 = vmatpush1.msra.mxu0 0.0
    %1515 = vmatprep.subr.mxu0 0.0
    %1516 = vmatpush1.msra.mxu0 0.0
    %1517 = vmatprep.subr.mxu0 0.0
    %1518 = vmatpush1.msra.mxu0 0.0
    %1519 = vmatprep.subr.mxu0 0.0
    %1520 = vmatpush1.msra.mxu0 0.0
    %1521 = vmatprep.subr.mxu0 0.0
    %1522 = vmatpush1.msra.mxu0 0.0
    %1523 = vmatprep.subr.mxu0 0.0
    %1524 = vmatpush1.msra.mxu0 0.0
    %1525 = vmatprep.subr.mxu0 0.0
    %1526 = vmatpush1.msra.mxu0 0.0
    %1527 = vmatprep.subr.mxu0 0.0
    %1528 = vmatpush1.msra.mxu0 0.0
    %1529 = vmatprep.subr.mxu0 0.0
    %1530 = vmatpush1.msra.mxu0 0.0
    %1531 = vmatprep.subr.mxu0 0.0
    %1532 = vmatpush1.msra.mxu0 0.0
    %1533 = vmatprep.subr.mxu0 0.0
    %1534 = vmatpush1.msra.mxu0 0.0
    %1535 = vmatprep.subr.mxu0 0.0
    %1536 = vmatpush1.msra.mxu0 0.0
    %1537 = vmatprep.subr.mxu0 0.0
    %1538 = vmatpush1.msra.mxu0 0.0
    %1539 = vmatprep.subr.mxu0 0.0
    %1540 = vmatpush1.msra.mxu0 %v36
    %1541 = vmatprep.subr.mxu0 0.0
    %1542 = vmatpush2.msra.mxu0 0.0
    %1543 = vmatprep.subr.mxu0 0.0
    %1544 = vmatpush2.msra.mxu0 0.0
    %1545 = vmatprep.subr.mxu0 0.0
    %1546 = vmatpush2.msra.mxu0 0.0
    %1547 = vmatprep.subr.mxu0 0.0
    %1548 = vmatpush2.msra.mxu0 0.0
    %1549 = vmatprep.subr.mxu0 0.0
    %1550 = vmatpush2.msra.mxu0 0.0
    %1551 = vmatprep.subr.mxu0 0.0
    %1552 = vmatpush2.msra.mxu0 0.0
    %1553 = vmatprep.subr.mxu0 0.0
    %1554 = vmatpush2.msra.mxu0 0.0
    %1555 = vmatprep.subr.mxu0 0.0
    %1556 = vmatpush2.msra.mxu0 0.0
    %1557 = vmatprep.subr.mxu0 0.0
    %1558 = vmatpush2.msra.mxu0 0.0
    %1559 = vmatprep.subr.mxu0 0.0
    %1560 = vmatpush2.msra.mxu0 0.0
    %1561 = vmatprep.subr.mxu0 0.0
    %1562 = vmatpush2.msra.mxu0 0.0
    %1563 = vmatprep.subr.mxu0 0.0
    %1564 = vmatpush2.msra.mxu0 0.0
    %1565 = vmatprep.subr.mxu0 0.0
    %1566 = vmatpush2.msra.mxu0 0.0
    %1567 = vmatprep.subr.mxu0 0.0
    %1568 = vmatpush2.msra.mxu0 0.0
    %1569 = vmatprep.subr.mxu0 0.0
    %1570 = vmatpush2.msra.mxu0 0.0
    %1571 = vmatprep.subr.mxu0 0.0
    %1572 = vmatpush2.msra.mxu0 0.0
    %1573 = vmatprep.mubr.f32.mxu0 0.0
    %1574 = vmatmul.mubr.f32.gmra.mxu0 %v1507
    %v1575 = vpop.f32.mrf.mxu0
    %v1576 = vadd.f32 %v1503, %v1575
    %v1577 = vpop.f32.mrf.mxu0
    %1578 = vdwg.mxu0
    %1579 = vrot.lane.b32.xlu0 %v133, 112
    %v1580 = vpop.permute.xlu0 %1579
    %1581 = vrot.lane.b32.xlu0 %v143, 80
    %v1582 = vpop.permute.xlu0 %1581
    %v1583 = vsel %vm157, %v1580, 0
    %v1585 = vsel %vm157, %v1582, 0
    %1587 = vmatprep.subr.mxu0 0.0
    %1588 = vmatpush1.xpose.msra.mxu0 0.0
    %1589 = vmatprep.subr.mxu0 0.0
    %1590 = vmatpush1.xpose.msra.mxu0 0.0
    %1591 = vmatprep.subr.mxu0 0.0
    %1592 = vmatpush1.xpose.msra.mxu0 0.0
    %1593 = vmatprep.subr.mxu0 0.0
    %1594 = vmatpush1.xpose.msra.mxu0 0.0
    %1595 = vmatprep.subr.mxu0 0.0
    %1596 = vmatpush1.xpose.msra.mxu0 0.0
    %1597 = vmatprep.subr.mxu0 0.0
    %1598 = vmatpush1.xpose.msra.mxu0 0.0
    %1599 = vmatprep.subr.mxu0 0.0
    %1600 = vmatpush1.xpose.msra.mxu0 0.0
    %1601 = vmatprep.subr.mxu0 0.0
    %1602 = vmatpush1.xpose.msra.mxu0 0.0
    %1603 = vmatprep.subr.mxu0 0.0
    %1604 = vmatpush1.xpose.msra.mxu0 0.0
    %1605 = vmatprep.subr.mxu0 0.0
    %1606 = vmatpush1.xpose.msra.mxu0 0.0
    %1607 = vmatprep.subr.mxu0 0.0
    %1608 = vmatpush1.xpose.msra.mxu0 0.0
    %1609 = vmatprep.subr.mxu0 0.0
    %1610 = vmatpush1.xpose.msra.mxu0 0.0
    %1611 = vmatprep.subr.mxu0 0.0
    %1612 = vmatpush1.xpose.msra.mxu0 0.0
    %1613 = vmatprep.subr.mxu0 0.0
    %1614 = vmatpush1.xpose.msra.mxu0 0.0
    %1615 = vmatprep.subr.mxu0 0.0
    %1616 = vmatpush1.xpose.msra.mxu0 0.0
    %1617 = vmatprep.subr.mxu0 0.0
    %1618 = vmatpush1.xpose.msra.mxu0 %v1585
    %1619 = vmatprep.subr.mxu0 0.0
    %1620 = vmatpush2.xpose.msra.mxu0 0.0
    %1621 = vmatprep.subr.mxu0 0.0
    %1622 = vmatpush2.xpose.msra.mxu0 0.0
    %1623 = vmatprep.subr.mxu0 0.0
    %1624 = vmatpush2.xpose.msra.mxu0 0.0
    %1625 = vmatprep.subr.mxu0 0.0
    %1626 = vmatpush2.xpose.msra.mxu0 0.0
    %1627 = vmatprep.subr.mxu0 0.0
    %1628 = vmatpush2.xpose.msra.mxu0 0.0
    %1629 = vmatprep.subr.mxu0 0.0
    %1630 = vmatpush2.xpose.msra.mxu0 0.0
    %1631 = vmatprep.subr.mxu0 0.0
    %1632 = vmatpush2.xpose.msra.mxu0 0.0
    %1633 = vmatprep.subr.mxu0 0.0
    %1634 = vmatpush2.xpose.msra.mxu0 0.0
    %1635 = vmatprep.subr.mxu0 0.0
    %1636 = vmatpush2.xpose.msra.mxu0 0.0
    %1637 = vmatprep.subr.mxu0 0.0
    %1638 = vmatpush2.xpose.msra.mxu0 0.0
    %1639 = vmatprep.subr.mxu0 0.0
    %1640 = vmatpush2.xpose.msra.mxu0 0.0
    %1641 = vmatprep.subr.mxu0 0.0
    %1642 = vmatpush2.xpose.msra.mxu0 0.0
    %1643 = vmatprep.subr.mxu0 0.0
    %1644 = vmatpush2.xpose.msra.mxu0 0.0
    %1645 = vmatprep.subr.mxu0 0.0
    %1646 = vmatpush2.xpose.msra.mxu0 0.0
    %1647 = vmatprep.subr.mxu0 0.0
    %1648 = vmatpush2.xpose.msra.mxu0 0.0
    %1649 = vmatprep.subr.mxu0 0.0
    %1650 = vmatpush2.xpose.msra.mxu0 0.0
    %1651 = vmatprep.mubr.f32.mxu0 0.0
    %1652 = vmatmul.mubr.f32.gmra.mxu0 %v1583
    %v1653 = vpop.f32.mrf.mxu0
    %v1654 = vadd.f32 %v1105, %v1653
    %v1655 = vpop.f32.mrf.mxu0
    %1656 = vdwg.mxu0
    %v1657 = vsel %vm157, %v1654, -inf
    %1658 = vmax.xlane.f32.xlu0 %v1657
    %v1659 = vpop.xlane.xlu0 %1658
    %v1660 = vsub.f32 %v1654, %v1659
    %v1661 = vmul.f32 %v1660, 1.442695
    %v1662 = vpow.pop %v1661
    %v1663 = vsel %vm157, %v1662, 0.0
    %1664 = vadd.xlane.f32.xlu0 %v1663
    %v1665 = vpop.xlane.xlu0 %1664
    %v1666 = vrcp.pop %v1665
    %v1667 = vmul.f32 %v1662, %v1666
    %v1670 = vsel %vm157, %v1667, 0
    %1672 = vmatprep.subr.mxu0 0.0
    %1673 = vmatpush1.msra.mxu0 0.0
    %1674 = vmatprep.subr.mxu0 0.0
    %1675 = vmatpush1.msra.mxu0 0.0
    %1676 = vmatprep.subr.mxu0 0.0
    %1677 = vmatpush1.msra.mxu0 0.0
    %1678 = vmatprep.subr.mxu0 0.0
    %1679 = vmatpush1.msra.mxu0 0.0
    %1680 = vmatprep.subr.mxu0 0.0
    %1681 = vmatpush1.msra.mxu0 0.0
    %1682 = vmatprep.subr.mxu0 0.0
    %1683 = vmatpush1.msra.mxu0 0.0
    %1684 = vmatprep.subr.mxu0 0.0
    %1685 = vmatpush1.msra.mxu0 0.0
    %1686 = vmatprep.subr.mxu0 0.0
    %1687 = vmatpush1.msra.mxu0 0.0
    %1688 = vmatprep.subr.mxu0 0.0
    %1689 = vmatpush1.msra.mxu0 0.0
    %1690 = vmatprep.subr.mxu0 0.0
    %1691 = vmatpush1.msra.mxu0 0.0
    %1692 = vmatprep.subr.mxu0 0.0
    %1693 = vmatpush1.msra.mxu0 0.0
    %1694 = vmatprep.subr.mxu0 0.0
    %1695 = vmatpush1.msra.mxu0 0.0
    %1696 = vmatprep.subr.mxu0 0.0
    %1697 = vmatpush1.msra.mxu0 0.0
    %1698 = vmatprep.subr.mxu0 0.0
    %1699 = vmatpush1.msra.mxu0 0.0
    %1700 = vmatprep.subr.mxu0 0.0
    %1701 = vmatpush1.msra.mxu0 0.0
    %1702 = vmatprep.subr.mxu0 0.0
    %1703 = vmatpush1.msra.mxu0 %v1582
    %1704 = vmatprep.subr.mxu0 0.0
    %1705 = vmatpush2.msra.mxu0 0.0
    %1706 = vmatprep.subr.mxu0 0.0
    %1707 = vmatpush2.msra.mxu0 0.0
    %1708 = vmatprep.subr.mxu0 0.0
    %1709 = vmatpush2.msra.mxu0 0.0
    %1710 = vmatprep.subr.mxu0 0.0
    %1711 = vmatpush2.msra.mxu0 0.0
    %1712 = vmatprep.subr.mxu0 0.0
    %1713 = vmatpush2.msra.mxu0 0.0
    %1714 = vmatprep.subr.mxu0 0.0
    %1715 = vmatpush2.msra.mxu0 0.0
    %1716 = vmatprep.subr.mxu0 0.0
    %1717 = vmatpush2.msra.mxu0 0.0
    %1718 = vmatprep.subr.mxu0 0.0
    %1719 = vmatpush2.msra.mxu0 0.0
    %1720 = vmatprep.subr.mxu0 0.0
    %1721 = vmatpush2.msra.mxu0 0.0
    %1722 = vmatprep.subr.mxu0 0.0
    %1723 = vmatpush2.msra.mxu0 0.0
    %1724 = vmatprep.subr.mxu0 0.0
    %1725 = vmatpush2.msra.mxu0 0.0
    %1726 = vmatprep.subr.mxu0 0.0
    %1727 = vmatpush2.msra.mxu0 0.0
    %1728 = vmatprep.subr.mxu0 0.0
    %1729 = vmatpush2.msra.mxu0 0.0
    %1730 = vmatprep.subr.mxu0 0.0
    %1731 = vmatpush2.msra.mxu0 0.0
    %1732 = vmatprep.subr.mxu0 0.0
    %1733 = vmatpush2.msra.mxu0 0.0
    %1734 = vmatprep.subr.mxu0 0.0
    %1735 = vmatpush2.msra.mxu0 0.0
    %1736 = vmatprep.mubr.f32.mxu0 0.0
    %1737 = vmatmul.mubr.f32.gmra.mxu0 %v1670
    %v1738 = vpop.f32.mrf.mxu0
    %v1739 = vadd.f32 0.0, %v1738
    %v1740 = vpop.f32.mrf.mxu0
    %1741 = vdwg.mxu0
    %v1743 = vsel %vm157, %v1739, 0
    %1745 = vmatprep.subr.mxu0 0.0
    %1746 = vmatpush1.msra.mxu0 0.0
    %1747 = vmatprep.subr.mxu0 0.0
    %1748 = vmatpush1.msra.mxu0 0.0
    %1749 = vmatprep.subr.mxu0 0.0
    %1750 = vmatpush1.msra.mxu0 0.0
    %1751 = vmatprep.subr.mxu0 0.0
    %1752 = vmatpush1.msra.mxu0 0.0
    %1753 = vmatprep.subr.mxu0 0.0
    %1754 = vmatpush1.msra.mxu0 0.0
    %1755 = vmatprep.subr.mxu0 0.0
    %1756 = vmatpush1.msra.mxu0 0.0
    %1757 = vmatprep.subr.mxu0 0.0
    %1758 = vmatpush1.msra.mxu0 0.0
    %1759 = vmatprep.subr.mxu0 0.0
    %1760 = vmatpush1.msra.mxu0 0.0
    %1761 = vmatprep.subr.mxu0 0.0
    %1762 = vmatpush1.msra.mxu0 0.0
    %1763 = vmatprep.subr.mxu0 0.0
    %1764 = vmatpush1.msra.mxu0 0.0
    %1765 = vmatprep.subr.mxu0 0.0
    %1766 = vmatpush1.msra.mxu0 0.0
    %1767 = vmatprep.subr.mxu0 0.0
    %1768 = vmatpush1.msra.mxu0 0.0
    %1769 = vmatprep.subr.mxu0 0.0
    %1770 = vmatpush1.msra.mxu0 0.0
    %1771 = vmatprep.subr.mxu0 0.0
    %1772 = vmatpush1.msra.mxu0 0.0
    %1773 = vmatprep.subr.mxu0 0.0
    %1774 = vmatpush1.msra.mxu0 0.0
    %1775 = vmatprep.subr.mxu0 0.0
    %1776 = vmatpush1.msra.mxu0 %v38
    %1777 = vmatprep.subr.mxu0 0.0
    %1778 = vmatpush2.msra.mxu0 0.0
    %1779 = vmatprep.subr.mxu0 0.0
    %1780 = vmatpush2.msra.mxu0 0.0
    %1781 = vmatprep.subr.mxu0 0.0
    %1782 = vmatpush2.msra.mxu0 0.0
    %1783 = vmatprep.subr.mxu0 0.0
    %1784 = vmatpush2.msra.mxu0 0.0
    %1785 = vmatprep.subr.mxu0 0.0
    %1786 = vmatpush2.msra.mxu0 0.0
    %1787 = vmatprep.subr.mxu0 0.0
    %1788 = vmatpush2.msra.mxu0 0.0
    %1789 = vmatprep.subr.mxu0 0.0
    %1790 = vmatpush2.msra.mxu0 0.0
    %1791 = vmatprep.subr.mxu0 0.0
    %1792 = vmatpush2.msra.mxu0 0.0
    %1793 = vmatprep.subr.mxu0 0.0
    %1794 = vmatpush2.msra.mxu0 0.0
    %1795 = vmatprep.subr.mxu0 0.0
    %1796 = vmatpush2.msra.mxu0 0.0
    %1797 = vmatprep.subr.mxu0 0.0
    %1798 = vmatpush2.msra.mxu0 0.0
    %1799 = vmatprep.subr.mxu0 0.0
    %1800 = vmatpush2.msra.mxu0 0.0
    %1801 = vmatprep.subr.mxu0 0.0
    %1802 = vmatpush2.msra.mxu0 0.0
    %1803 = vmatprep.subr.mxu0 0.0
    %1804 = vmatpush2.msra.mxu0 0.0
    %1805 = vmatprep.subr.mxu0 0.0
    %1806 = vmatpush2.msra.mxu0 0.0
    %1807 = vmatprep.subr.mxu0 0.0
    %1808 = vmatpush2.msra.mxu0 0.0
    %1809 = vmatprep.mubr.f32.mxu0 0.0
    %1810 = vmatmul.mubr.f32.gmra.mxu0 %v1743
    %v1811 = vpop.f32.mrf.mxu0
    %v1812 = vadd.f32 0.0, %v1811
    %v1813 = vpop.f32.mrf.mxu0
    %1814 = vdwg.mxu0
    %v1815 = vadd.f32 %v1576, %v1812
    %1816 = vrot.lane.b32.xlu0 %v133, 104
    %v1817 = vpop.permute.xlu0 %1816
    %1818 = vrot.lane.b32.xlu0 %v143, 72
    %v1819 = vpop.permute.xlu0 %1818
    %v1820 = vsel %vm157, %v1817, 0
    %v1822 = vsel %vm157, %v1819, 0
    %1824 = vmatprep.subr.mxu0 0.0
    %1825 = vmatpush1.xpose.msra.mxu0 0.0
    %1826 = vmatprep.subr.mxu0 0.0
    %1827 = vmatpush1.xpose.msra.mxu0 0.0
    %1828 = vmatprep.subr.mxu0 0.0
    %1829 = vmatpush1.xpose.msra.mxu0 0.0
    %1830 = vmatprep.subr.mxu0 0.0
    %1831 = vmatpush1.xpose.msra.mxu0 0.0
    %1832 = vmatprep.subr.mxu0 0.0
    %1833 = vmatpush1.xpose.msra.mxu0 0.0
    %1834 = vmatprep.subr.mxu0 0.0
    %1835 = vmatpush1.xpose.msra.mxu0 0.0
    %1836 = vmatprep.subr.mxu0 0.0
    %1837 = vmatpush1.xpose.msra.mxu0 0.0
    %1838 = vmatprep.subr.mxu0 0.0
    %1839 = vmatpush1.xpose.msra.mxu0 0.0
    %1840 = vmatprep.subr.mxu0 0.0
    %1841 = vmatpush1.xpose.msra.mxu0 0.0
    %1842 = vmatprep.subr.mxu0 0.0
    %1843 = vmatpush1.xpose.msra.mxu0 0.0
    %1844 = vmatprep.subr.mxu0 0.0
    %1845 = vmatpush1.xpose.msra.mxu0 0.0
    %1846 = vmatprep.subr.mxu0 0.0
    %1847 = vmatpush1.xpose.msra.mxu0 0.0
    %1848 = vmatprep.subr.mxu0 0.0
    %1849 = vmatpush1.xpose.msra.mxu0 0.0
    %1850 = vmatprep.subr.mxu0 0.0
    %1851 = vmatpush1.xpose.msra.mxu0 0.0
    %1852 = vmatprep.subr.mxu0 0.0
    %1853 = vmatpush1.xpose.msra.mxu0 0.0
    %1854 = vmatprep.subr.mxu0 0.0
    %1855 = vmatpush1.xpose.msra.mxu0 %v1822
    %1856 = vmatprep.subr.mxu0 0.0
    %1857 = vmatpush2.xpose.msra.mxu0 0.0
    %1858 = vmatprep.subr.mxu0 0.0
    %1859 = vmatpush2.xpose.msra.mxu0 0.0
    %1860 = vmatprep.subr.mxu0 0.0
    %1861 = vmatpush2.xpose.msra.mxu0 0.0
    %1862 = vmatprep.subr.mxu0 0.0
    %1863 = vmatpush2.xpose.msra.mxu0 0.0
    %1864 = vmatprep.subr.mxu0 0.0
    %1865 = vmatpush2.xpose.msra.mxu0 0.0
    %1866 = vmatprep.subr.mxu0 0.0
    %1867 = vmatpush2.xpose.msra.mxu0 0.0
    %1868 = vmatprep.subr.mxu0 0.0
    %1869 = vmatpush2.xpose.msra.mxu0 0.0
    %1870 = vmatprep.subr.mxu0 0.0
    %1871 = vmatpush2.xpose.msra.mxu0 0.0
    %1872 = vmatprep.subr.mxu0 0.0
    %1873 = vmatpush2.xpose.msra.mxu0 0.0
    %1874 = vmatprep.subr.mxu0 0.0
    %1875 = vmatpush2.xpose.msra.mxu0 0.0
    %1876 = vmatprep.subr.mxu0 0.0
    %1877 = vmatpush2.xpose.msra.mxu0 0.0
    %1878 = vmatprep.subr.mxu0 0.0
    %1879 = vmatpush2.xpose.msra.mxu0 0.0
    %1880 = vmatprep.subr.mxu0 0.0
    %1881 = vmatpush2.xpose.msra.mxu0 0.0
    %1882 = vmatprep.subr.mxu0 0.0
    %1883 = vmatpush2.xpose.msra.mxu0 0.0
    %1884 = vmatprep.subr.mxu0 0.0
    %1885 = vmatpush2.xpose.msra.mxu0 0.0
    %1886 = vmatprep.subr.mxu0 0.0
    %1887 = vmatpush2.xpose.msra.mxu0 0.0
    %1888 = vmatprep.mubr.f32.mxu0 0.0
    %1889 = vmatmul.mubr.f32.gmra.mxu0 %v1820
    %v1890 = vpop.f32.mrf.mxu0
    %v1891 = vadd.f32 %v1105, %v1890
    %v1892 = vpop.f32.mrf.mxu0
    %1893 = vdwg.mxu0
    %v1894 = vsel %vm157, %v1891, -inf
    %1895 = vmax.xlane.f32.xlu0 %v1894
    %v1896 = vpop.xlane.xlu0 %1895
    %v1897 = vsub.f32 %v1891, %v1896
    %v1898 = vmul.f32 %v1897, 1.442695
    %v1899 = vpow.pop %v1898
    %v1900 = vsel %vm157, %v1899, 0.0
    %1901 = vadd.xlane.f32.xlu0 %v1900
    %v1902 = vpop.xlane.xlu0 %1901
    %v1903 = vrcp.pop %v1902
    %v1904 = vmul.f32 %v1899, %v1903
    %v1907 = vsel %vm157, %v1904, 0
    %1909 = vmatprep.subr.mxu0 0.0
    %1910 = vmatpush1.msra.mxu0 0.0
    %1911 = vmatprep.subr.mxu0 0.0
    %1912 = vmatpush1.msra.mxu0 0.0
    %1913 = vmatprep.subr.mxu0 0.0
    %1914 = vmatpush1.msra.mxu0 0.0
    %1915 = vmatprep.subr.mxu0 0.0
    %1916 = vmatpush1.msra.mxu0 0.0
    %1917 = vmatprep.subr.mxu0 0.0
    %1918 = vmatpush1.msra.mxu0 0.0
    %1919 = vmatprep.subr.mxu0 0.0
    %1920 = vmatpush1.msra.mxu0 0.0
    %1921 = vmatprep.subr.mxu0 0.0
    %1922 = vmatpush1.msra.mxu0 0.0
    %1923 = vmatprep.subr.mxu0 0.0
    %1924 = vmatpush1.msra.mxu0 0.0
    %1925 = vmatprep.subr.mxu0 0.0
    %1926 = vmatpush1.msra.mxu0 0.0
    %1927 = vmatprep.subr.mxu0 0.0
    %1928 = vmatpush1.msra.mxu0 0.0
    %1929 = vmatprep.subr.mxu0 0.0
    %1930 = vmatpush1.msra.mxu0 0.0
    %1931 = vmatprep.subr.mxu0 0.0
    %1932 = vmatpush1.msra.mxu0 0.0
    %1933 = vmatprep.subr.mxu0 0.0
    %1934 = vmatpush1.msra.mxu0 0.0
    %1935 = vmatprep.subr.mxu0 0.0
    %1936 = vmatpush1.msra.mxu0 0.0
    %1937 = vmatprep.subr.mxu0 0.0
    %1938 = vmatpush1.msra.mxu0 0.0
    %1939 = vmatprep.subr.mxu0 0.0
    %1940 = vmatpush1.msra.mxu0 %v1819
    %1941 = vmatprep.subr.mxu0 0.0
    %1942 = vmatpush2.msra.mxu0 0.0
    %1943 = vmatprep.subr.mxu0 0.0
    %1944 = vmatpush2.msra.mxu0 0.0
    %1945 = vmatprep.subr.mxu0 0.0
    %1946 = vmatpush2.msra.mxu0 0.0
    %1947 = vmatprep.subr.mxu0 0.0
    %1948 = vmatpush2.msra.mxu0 0.0
    %1949 = vmatprep.subr.mxu0 0.0
    %1950 = vmatpush2.msra.mxu0 0.0
    %1951 = vmatprep.subr.mxu0 0.0
    %1952 = vmatpush2.msra.mxu0 0.0
    %1953 = vmatprep.subr.mxu0 0.0
    %1954 = vmatpush2.msra.mxu0 0.0
    %1955 = vmatprep.subr.mxu0 0.0
    %1956 = vmatpush2.msra.mxu0 0.0
    %1957 = vmatprep.subr.mxu0 0.0
    %1958 = vmatpush2.msra.mxu0 0.0
    %1959 = vmatprep.subr.mxu0 0.0
    %1960 = vmatpush2.msra.mxu0 0.0
    %1961 = vmatprep.subr.mxu0 0.0
    %1962 = vmatpush2.msra.mxu0 0.0
    %1963 = vmatprep.subr.mxu0 0.0
    %1964 = vmatpush2.msra.mxu0 0.0
    %1965 = vmatprep.subr.mxu0 0.0
    %1966 = vmatpush2.msra.mxu0 0.0
    %1967 = vmatprep.subr.mxu0 0.0
    %1968 = vmatpush2.msra.mxu0 0.0
    %1969 = vmatprep.subr.mxu0 0.0
    %1970 = vmatpush2.msra.mxu0 0.0
    %1971 = vmatprep.subr.mxu0 0.0
    %1972 = vmatpush2.msra.mxu0 0.0
    %1973 = vmatprep.mubr.f32.mxu0 0.0
    %1974 = vmatmul.mubr.f32.gmra.mxu0 %v1907
    %v1975 = vpop.f32.mrf.mxu0
    %v1976 = vadd.f32 0.0, %v1975
    %v1977 = vpop.f32.mrf.mxu0
    %1978 = vdwg.mxu0
    %v1980 = vsel %vm157, %v1976, 0
    %1982 = vmatprep.subr.mxu0 0.0
    %1983 = vmatpush1.msra.mxu0 0.0
    %1984 = vmatprep.subr.mxu0 0.0
    %1985 = vmatpush1.msra.mxu0 0.0
    %1986 = vmatprep.subr.mxu0 0.0
    %1987 = vmatpush1.msra.mxu0 0.0
    %1988 = vmatprep.subr.mxu0 0.0
    %1989 = vmatpush1.msra.mxu0 0.0
    %1990 = vmatprep.subr.mxu0 0.0
    %1991 = vmatpush1.msra.mxu0 0.0
    %1992 = vmatprep.subr.mxu0 0.0
    %1993 = vmatpush1.msra.mxu0 0.0
    %1994 = vmatprep.subr.mxu0 0.0
    %1995 = vmatpush1.msra.mxu0 0.0
    %1996 = vmatprep.subr.mxu0 0.0
    %1997 = vmatpush1.msra.mxu0 0.0
    %1998 = vmatprep.subr.mxu0 0.0
    %1999 = vmatpush1.msra.mxu0 0.0
    %2000 = vmatprep.subr.mxu0 0.0
    %2001 = vmatpush1.msra.mxu0 0.0
    %2002 = vmatprep.subr.mxu0 0.0
    %2003 = vmatpush1.msra.mxu0 0.0
    %2004 = vmatprep.subr.mxu0 0.0
    %2005 = vmatpush1.msra.mxu0 0.0
    %2006 = vmatprep.subr.mxu0 0.0
    %2007 = vmatpush1.msra.mxu0 0.0
    %2008 = vmatprep.subr.mxu0 0.0
    %2009 = vmatpush1.msra.mxu0 0.0
    %2010 = vmatprep.subr.mxu0 0.0
    %2011 = vmatpush1.msra.mxu0 0.0
    %2012 = vmatprep.subr.mxu0 0.0
    %2013 = vmatpush1.msra.mxu0 %v39
    %2014 = vmatprep.subr.mxu0 0.0
    %2015 = vmatpush2.msra.mxu0 0.0
    %2016 = vmatprep.subr.mxu0 0.0
    %2017 = vmatpush2.msra.mxu0 0.0
    %2018 = vmatprep.subr.mxu0 0.0
    %2019 = vmatpush2.msra.mxu0 0.0
    %2020 = vmatprep.subr.mxu0 0.0
    %2021 = vmatpush2.msra.mxu0 0.0
    %2022 = vmatprep.subr.mxu0 0.0
    %2023 = vmatpush2.msra.mxu0 0.0
    %2024 = vmatprep.subr.mxu0 0.0
    %2025 = vmatpush2.msra.mxu0 0.0
    %2026 = vmatprep.subr.mxu0 0.0
    %2027 = vmatpush2.msra.mxu0 0.0
    %2028 = vmatprep.subr.mxu0 0.0
    %2029 = vmatpush2.msra.mxu0 0.0
    %2030 = vmatprep.subr.mxu0 0.0
    %2031 = vmatpush2.msra.mxu0 0.0
    %2032 = vmatprep.subr.mxu0 0.0
    %2033 = vmatpush2.msra.mxu0 0.0
    %2034 = vmatprep.subr.mxu0 0.0
    %2035 = vmatpush2.msra.mxu0 0.0
    %2036 = vmatprep.subr.mxu0 0.0
    %2037 = vmatpush2.msra.mxu0 0.0
    %2038 = vmatprep.subr.mxu0 0.0
    %2039 = vmatpush2.msra.mxu0 0.0
    %2040 = vmatprep.subr.mxu0 0.0
    %2041 = vmatpush2.msra.mxu0 0.0
    %2042 = vmatprep.subr.mxu0 0.0
    %2043 = vmatpush2.msra.mxu0 0.0
    %2044 = vmatprep.subr.mxu0 0.0
    %2045 = vmatpush2.msra.mxu0 0.0
    %2046 = vmatprep.mubr.f32.mxu0 0.0
    %2047 = vmatmul.mubr.f32.gmra.mxu0 %v1980
    %v2048 = vpop.f32.mrf.mxu0
    %v2049 = vadd.f32 0.0, %v2048
    %v2050 = vpop.f32.mrf.mxu0
    %2051 = vdwg.mxu0
    %v2052 = vadd.f32 %v1815, %v2049
    %v2053 = vlaneseq
    %v2054 = vshrl.u32 %v2053, 7
    %v2055 = vsub.s32 2, %v2054
    %v2056 = vrot.slane %v34, %v2055
    %v2057 = vadd.f32 %v1100, %v2056
    %v2058 = vadd.f32 %v2052, %v2056
    %v2059 = vadd.f32 %v2057, %v30
    %v2060 = vadd.f32 %v2058, %v31
    %v2061 = vsel %vm44, %v2059, 0.0
    %2062 = vadd.xlane.f32.xlu0 %v2061
    %v2063 = vpop.xlane.xlu0 %2062
    %v2064 = vsel %vm44, %v2060, 0.0
    %2065 = vadd.xlane.f32.xlu0 %v2064
    %v2066 = vpop.xlane.xlu0 %2065
    %v2067 = vrcp.pop 32.0
    %v2068 = vmul.f32 %v2063, %v2067
    %v2069 = vmul.f32 %v2066, %v2067
    %v2070 = vsub.f32 %v2059, %v2068
    %v2071 = vsub.f32 %v2060, %v2069
    %v2072 = vmul.f32 %v2070, %v2070
    %v2073 = vmul.f32 %v2071, %v2071
    %v2074 = vsel %vm44, %v2072, 0.0
    %2075 = vadd.xlane.f32.xlu0 %v2074
    %v2076 = vpop.xlane.xlu0 %2075
    %v2077 = vsel %vm44, %v2073, 0.0
    %2078 = vadd.xlane.f32.xlu0 %v2077
    %v2079 = vpop.xlane.xlu0 %2078
    %v2080 = vmul.f32 %v2076, %v2067
    %v2081 = vmul.f32 %v2079, %v2067
    %v2082 = vadd.f32 %v2080, 1e-05
    %v2083 = vadd.f32 %v2081, 1e-05
    %v2084 = vrsqrt.pop %v2082
    %v2085 = vrsqrt.pop %v2083
    %v2086 = vmul.f32 %v2070, %v2084
    %v2087 = vmul.f32 %v2071, %v2085
    %v2088 = vlaneseq
    %v2089 = vshrl.u32 %v2088, 7
    %v2090 = vsub.s32 3, %v2089
    %v2091 = vrot.slane %v34, %v2090
    %v2092 = vmul.f32 %v2086, %v2091
    %v2093 = vmul.f32 %v2087, %v2091
    %v2094 = vlaneseq
    %v2095 = vshrl.u32 %v2094, 7
    %v2096 = vsub.s32 4, %v2095
    %v2097 = vrot.slane %v34, %v2096
    %v2098 = vadd.f32 %v2092, %v2097
    %v2099 = vadd.f32 %v2093, %v2097
    %v2100 = vld [vmem:[%s4] sm:$0xff]
    %v2101 = vld [vmem:[%s4 + $0x8] sm:$0xff]
    %v2102 = vld [vmem:[%s4 + $0x10] sm:$0xff]
    %v2103 = vld [vmem:[%s4 + $0x18] sm:$0xff]
    %v2105 = vlaneseq
    %v2106 = vshrl.u32 %v2105, 7
    %v2107 = vsub.s32 0, %v2106
    %v2108 = vrot.slane %v35, %v2107
    %v2111 = vsel %vm44, %v2098, 0
    %v2114 = vsel %vm44, %v2099, 0
    %2116 = vmatprep.subr.mxu0 0.0
    %2117 = vmatpush1.msra.mxu0 0.0
    %2118 = vmatprep.subr.mxu0 0.0
    %2119 = vmatpush1.msra.mxu0 0.0
    %2120 = vmatprep.subr.mxu0 0.0
    %2121 = vmatpush1.msra.mxu0 0.0
    %2122 = vmatprep.subr.mxu0 0.0
    %2123 = vmatpush1.msra.mxu0 0.0
    %2124 = vmatprep.subr.mxu0 0.0
    %2125 = vmatpush1.msra.mxu0 0.0
    %2126 = vmatprep.subr.mxu0 0.0
    %2127 = vmatpush1.msra.mxu0 0.0
    %2128 = vmatprep.subr.mxu0 0.0
    %2129 = vmatpush1.msra.mxu0 0.0
    %2130 = vmatprep.subr.mxu0 0.0
    %2131 = vmatpush1.msra.mxu0 0.0
    %2132 = vmatprep.subr.mxu0 0.0
    %2133 = vmatpush1.msra.mxu0 0.0
    %2134 = vmatprep.subr.mxu0 0.0
    %2135 = vmatpush1.msra.mxu0 0.0
    %2136 = vmatprep.subr.mxu0 0.0
    %2137 = vmatpush1.msra.mxu0 0.0
    %2138 = vmatprep.subr.mxu0 0.0
    %2139 = vmatpush1.msra.mxu0 0.0
    %2140 = vmatprep.subr.mxu0 0.0
    %2141 = vmatpush1.msra.mxu0 %v2103
    %2142 = vmatprep.subr.mxu0 0.0
    %2143 = vmatpush1.msra.mxu0 %v2102
    %2144 = vmatprep.subr.mxu0 0.0
    %2145 = vmatpush1.msra.mxu0 %v2101
    %2146 = vmatprep.subr.mxu0 0.0
    %2147 = vmatpush1.msra.mxu0 %v2100
    %2148 = vmatprep.subr.mxu0 0.0
    %2149 = vmatpush2.msra.mxu0 0.0
    %2150 = vmatprep.subr.mxu0 0.0
    %2151 = vmatpush2.msra.mxu0 0.0
    %2152 = vmatprep.subr.mxu0 0.0
    %2153 = vmatpush2.msra.mxu0 0.0
    %2154 = vmatprep.subr.mxu0 0.0
    %2155 = vmatpush2.msra.mxu0 0.0
    %2156 = vmatprep.subr.mxu0 0.0
    %2157 = vmatpush2.msra.mxu0 0.0
    %2158 = vmatprep.subr.mxu0 0.0
    %2159 = vmatpush2.msra.mxu0 0.0
    %2160 = vmatprep.subr.mxu0 0.0
    %2161 = vmatpush2.msra.mxu0 0.0
    %2162 = vmatprep.subr.mxu0 0.0
    %2163 = vmatpush2.msra.mxu0 0.0
    %2164 = vmatprep.subr.mxu0 0.0
    %2165 = vmatpush2.msra.mxu0 0.0
    %2166 = vmatprep.subr.mxu0 0.0
    %2167 = vmatpush2.msra.mxu0 0.0
    %2168 = vmatprep.subr.mxu0 0.0
    %2169 = vmatpush2.msra.mxu0 0.0
    %2170 = vmatprep.subr.mxu0 0.0
    %2171 = vmatpush2.msra.mxu0 0.0
    %2172 = vmatprep.subr.mxu0 0.0
    %2173 = vmatpush2.msra.mxu0 0.0
    %2174 = vmatprep.subr.mxu0 0.0
    %2175 = vmatpush2.msra.mxu0 0.0
    %2176 = vmatprep.subr.mxu0 0.0
    %2177 = vmatpush2.msra.mxu0 0.0
    %2178 = vmatprep.subr.mxu0 0.0
    %2179 = vmatpush2.msra.mxu0 0.0
    %2180 = vmatprep.mubr.f32.mxu0 0.0
    %2181 = vmatmul.mubr.f32.gmra.mxu0 %v2111
    %v2182 = vpop.f32.mrf.mxu0
    %v2183 = vadd.f32 %v2108, %v2182
    %v2184 = vpop.f32.mrf.mxu0
    %2185 = vmatprep.mubr.f32.mxu0 0.0
    %2186 = vmatmul.mubr.f32.gmra.mxu0 %v2114
    %v2187 = vpop.f32.mrf.mxu0
    %v2188 = vadd.f32 %v2108, %v2187
    %v2189 = vpop.f32.mrf.mxu0
    %2190 = vdwg.mxu0
    %v2191 = vmul.f32 %v2183, 0.5
    %v2192 = vmul.f32 %v2188, 0.5
    %v2193 = vrcp.pop 1.4142135
    %v2194 = vmul.f32 %v2183, %v2193
    %v2195 = vmul.f32 %v2188, %v2193
    %v2196 = verf.f32.pop %v2194
    %v2197 = verf.f32.pop %v2195
    %v2198 = vadd.f32 %v2196, 1.0
    %v2199 = vadd.f32 %v2197, 1.0
    %v2200 = vmul.f32 %v2191, %v2198
    %v2201 = vmul.f32 %v2192, %v2199
    %v2202 = vld [vmem:[%s5] sm:$0xff]
    %v2203 = vld [vmem:[%s5 + $0x8] sm:$0xff]
    %v2204 = vld [vmem:[%s5 + $0x10] sm:$0xff]
    %v2205 = vld [vmem:[%s5 + $0x18] sm:$0xff]
    %v2206 = vld [vmem:[%s5 + $0x20] sm:$0xff]
    %v2207 = vld [vmem:[%s5 + $0x28] sm:$0xff]
    %v2208 = vld [vmem:[%s5 + $0x30] sm:$0xff]
    %v2209 = vld [vmem:[%s5 + $0x38] sm:$0xff]
    %v2210 = vld [vmem:[%s5 + $0x40] sm:$0xff]
    %v2211 = vld [vmem:[%s5 + $0x48] sm:$0xff]
    %v2212 = vld [vmem:[%s5 + $0x50] sm:$0xff]
    %v2213 = vld [vmem:[%s5 + $0x58] sm:$0xff]
    %v2214 = vld [vmem:[%s5 + $0x60] sm:$0xff]
    %v2215 = vld [vmem:[%s5 + $0x68] sm:$0xff]
    %v2216 = vld [vmem:[%s5 + $0x70] sm:$0xff]
    %v2217 = vld [vmem:[%s5 + $0x78] sm:$0xff]
    %v2218 = vlaneseq
    %v2219 = vshrl.u32 %v2218, 7
    %v2220 = vsub.s32 7, %v2219
    %v2221 = vrot.slane %v34, %v2220
    %2222 = vmatprep.subr.mxu0 0.0
    %2223 = vmatpush1.msra.mxu0 %v2217
    %2224 = vmatprep.subr.mxu0 0.0
    %2225 = vmatpush1.msra.mxu0 %v2216
    %2226 = vmatprep.subr.mxu0 0.0
    %2227 = vmatpush1.msra.mxu0 %v2215
    %2228 = vmatprep.subr.mxu0 0.0
    %2229 = vmatpush1.msra.mxu0 %v2214
    %2230 = vmatprep.subr.mxu0 0.0
    %2231 = vmatpush1.msra.mxu0 %v2213
    %2232 = vmatprep.subr.mxu0 0.0
    %2233 = vmatpush1.msra.mxu0 %v2212
    %2234 = vmatprep.subr.mxu0 0.0
    %2235 = vmatpush1.msra.mxu0 %v2211
    %2236 = vmatprep.subr.mxu0 0.0
    %2237 = vmatpush1.msra.mxu0 %v2210
    %2238 = vmatprep.subr.mxu0 0.0
    %2239 = vmatpush1.msra.mxu0 %v2209
    %2240 = vmatprep.subr.mxu0 0.0
    %2241 = vmatpush1.msra.mxu0 %v2208
    %2242 = vmatprep.subr.mxu0 0.0
    %2243 = vmatpush1.msra.mxu0 %v2207
    %2244 = vmatprep.subr.mxu0 0.0
    %2245 = vmatpush1.msra.mxu0 %v2206
    %2246 = vmatprep.subr.mxu0 0.0
    %2247 = vmatpush1.msra.mxu0 %v2205
    %2248 = vmatprep.subr.mxu0 0.0
    %2249 = vmatpush1.msra.mxu0 %v2204
    %2250 = vmatprep.subr.mxu0 0.0
    %2251 = vmatpush1.msra.mxu0 %v2203
    %2252 = vmatprep.subr.mxu0 0.0
    %2253 = vmatpush1.msra.mxu0 %v2202
    %2254 = vmatprep.subr.mxu0 0.0
    %2255 = vmatpush2.msra.mxu0 0.0
    %2256 = vmatprep.subr.mxu0 0.0
    %2257 = vmatpush2.msra.mxu0 0.0
    %2258 = vmatprep.subr.mxu0 0.0
    %2259 = vmatpush2.msra.mxu0 0.0
    %2260 = vmatprep.subr.mxu0 0.0
    %2261 = vmatpush2.msra.mxu0 0.0
    %2262 = vmatprep.subr.mxu0 0.0
    %2263 = vmatpush2.msra.mxu0 0.0
    %2264 = vmatprep.subr.mxu0 0.0
    %2265 = vmatpush2.msra.mxu0 0.0
    %2266 = vmatprep.subr.mxu0 0.0
    %2267 = vmatpush2.msra.mxu0 0.0
    %2268 = vmatprep.subr.mxu0 0.0
    %2269 = vmatpush2.msra.mxu0 0.0
    %2270 = vmatprep.subr.mxu0 0.0
    %2271 = vmatpush2.msra.mxu0 0.0
    %2272 = vmatprep.subr.mxu0 0.0
    %2273 = vmatpush2.msra.mxu0 0.0
    %2274 = vmatprep.subr.mxu0 0.0
    %2275 = vmatpush2.msra.mxu0 0.0
    %2276 = vmatprep.subr.mxu0 0.0
    %2277 = vmatpush2.msra.mxu0 0.0
    %2278 = vmatprep.subr.mxu0 0.0
    %2279 = vmatpush2.msra.mxu0 0.0
    %2280 = vmatprep.subr.mxu0 0.0
    %2281 = vmatpush2.msra.mxu0 0.0
    %2282 = vmatprep.subr.mxu0 0.0
    %2283 = vmatpush2.msra.mxu0 0.0
    %2284 = vmatprep.subr.mxu0 0.0
    %2285 = vmatpush2.msra.mxu0 0.0
    %2286 = vmatprep.mubr.f32.mxu0 0.0
    %2287 = vmatmul.mubr.f32.gmra.mxu0 %v2200
    %v2288 = vpop.f32.mrf.mxu0
    %v2289 = vadd.f32 %v2221, %v2288
    %v2290 = vpop.f32.mrf.mxu0
    %2291 = vmatprep.mubr.f32.mxu0 0.0
    %2292 = vmatmul.mubr.f32.gmra.mxu0 %v2201
    %v2293 = vpop.f32.mrf.mxu0
    %v2294 = vadd.f32 %v2221, %v2293
    %v2295 = vpop.f32.mrf.mxu0
    %2296 = vdwg.mxu0
    %v2297 = vadd.f32 %v2289, %v2098
    %v2298 = vadd.f32 %v2294, %v2099
    %v2299 = vsel %vm44, %v2297, 0.0
    %2300 = vadd.xlane.f32.xlu0 %v2299
    %v2301 = vpop.xlane.xlu0 %2300
    %v2302 = vsel %vm44, %v2298, 0.0
    %2303 = vadd.xlane.f32.xlu0 %v2302
    %v2304 = vpop.xlane.xlu0 %2303
    %v2305 = vmul.f32 %v2301, %v2067
    %v2306 = vmul.f32 %v2304, %v2067
    %v2307 = vsub.f32 %v2297, %v2305
    %v2308 = vsub.f32 %v2298, %v2306
    %v2309 = vmul.f32 %v2307, %v2307
    %v2310 = vmul.f32 %v2308, %v2308
    %v2311 = vsel %vm44, %v2309, 0.0
    %2312 = vadd.xlane.f32.xlu0 %v2311
    %v2313 = vpop.xlane.xlu0 %2312
    %v2314 = vsel %vm44, %v2310, 0.0
    %2315 = vadd.xlane.f32.xlu0 %v2314
    %v2316 = vpop.xlane.xlu0 %2315
    %v2317 = vmul.f32 %v2313, %v2067
    %v2318 = vmul.f32 %v2316, %v2067
    %v2319 = vadd.f32 %v2317, 1e-05
    %v2320 = vadd.f32 %v2318, 1e-05
    %v2321 = vrsqrt.pop %v2319
    %v2322 = vrsqrt.pop %v2320
    %v2323 = vmul.f32 %v2307, %v2321
    %v2324 = vmul.f32 %v2308, %v2322
    %v2325 = vlaneseq
    %v2326 = vshrl.u32 %v2325, 7
    %v2327 = vsub.s32 5, %v2326
    %v2328 = vrot.slane %v34, %v2327
    %v2329 = vmul.f32 %v2323, %v2328
    %v2330 = vmul.f32 %v2324, %v2328
    %v2331 = vlaneseq
    %v2332 = vshrl.u32 %v2331, 7
    %v2333 = vsub.s32 6, %v2332
    %v2334 = vrot.slane %v34, %v2333
    %v2335 = vadd.f32 %v2329, %v2334
    %v2336 = vadd.f32 %v2330, %v2334
    %2337 = vst.msk [vmem:[#allocation2] sm:$0xff] %vm44, %v2335
    %2338 = vst.msk [vmem:[#allocation2 + $0x8] sm:$0xff] %vm44, %v2336
    // Predicated region
    $region34: #{tpu_custom_call.1} parent=1 // pred_check
      _
    $region35: #{tpu_custom_call.1} parent=1 // pred_check_branch
      %2340 = sbr.rel (0) target = $region37
    $region36: #{tpu_custom_call.1} parent=1 // pred_region
      %s2342 = ssub.s32 256, 256
      %2343 = vsyncadd [#allocation3], %s2342
      %s2344 = sshll.u32 [#allocation2], 4
      %s2345 = int_to_ptr.vmem [resolvable:$true] %s2344
      %2350 = dma.vmem_to_hbm [thread:$0]  %s2345, 256, %s8, [#allocation3], 128, 128, 8
    $region37: #{tpu_custom_call.1} parent=1 // pred_fallthru
      _
    // Predicated region
    $region38: #{tpu_custom_call.1} parent=1 // pred_check
      _
    $region39: #{tpu_custom_call.1} parent=1 // pred_check_branch
      %2352 = sbr.rel (0) target = $region41
    $region40: #{tpu_custom_call.1} parent=1 // pred_region
      %2353 = dma.done [#allocation3], 256
    $region41: #{tpu_custom_call.1} parent=1 // pred_fallthru
      _
    %2354 = vsyncpa [#allocation3], 1

</llo_original>
